<compile_context>
chip_gen: v7x
topology: tpu7x:2x2x1
jax: 0.10.0
libtpu: 0.0.40
codegen_flags: <defaults>
</compile_context>

<pallas_src>
import functools
import math

import jax
import jax.numpy as jnp
from jax import lax
from jax.experimental import pallas as pl
from jax.experimental.pallas import tpu as pltpu


def _mab_pool_kernel(s_ref, q_ref, x_ref, w_ref, p_ref, out_ref,
                     *, num_heads, dim_mq, dim_mv, scale, eps):
    tb, n, d = x_ref.shape
    s_rows = s_ref.shape[0]
    cdt = x_ref.dtype                                   # compute (matmul operand) dtype

    seeds = s_ref[...].astype(jnp.float32)              # [S, D]      (f32, for residual)
    q = q_ref[...]                                      # [S, H*mq]   (cdt, seeds@Wq+bq, hoisted)
    pp = p_ref[...].astype(jnp.float32)                 # [8, D]      packed small params
    bk, bv, bo = pp[0:1, :], pp[1:2, :], pp[2:3, :]
    g0, b0 = pp[3:4, :], pp[4:5, :]
    g1, b1 = pp[5:6, :], pp[6:7, :]

    wk = w_ref[0]                                       # [D, H*mq]   (cdt)
    wv = w_ref[1]                                       # [D, H*mv]
    wo = w_ref[2]                                       # [H*mv, D]

    # --- k / v projections over all tb*n set points at once (fills the MXU) ---
    x2 = x_ref[...].reshape(tb * n, d)                  # [tb*N, D]
    k = (jnp.dot(x2, wk, preferred_element_type=jnp.float32) + bk).astype(cdt)
    v = (jnp.dot(x2, wv, preferred_element_type=jnp.float32) + bv).astype(cdt)
    k3 = k.reshape(tb, n, num_heads * dim_mq)
    v3 = v.reshape(tb, n, num_heads * dim_mv)
    q3 = jnp.broadcast_to(q[None], (tb, s_rows, num_heads * dim_mq))  # hoisted broadcast

    # --- per-head attention; accumulate straight through Wo (no head concat) ---
    acc = jnp.zeros((tb * s_rows, d), jnp.float32)
    for h in range(num_heads):
        qh = q3[:, :, h * dim_mq:(h + 1) * dim_mq]      # [tb, S, mq]
        kh = k3[:, :, h * dim_mq:(h + 1) * dim_mq]      # [tb, N, mq]
        vh = v3[:, :, h * dim_mv:(h + 1) * dim_mv]      # [tb, N, mv]

        # contract the head dim directly (no materialized transpose of k)
        sc = jnp.einsum('bsq,bkq->bsk', qh, kh,
                        preferred_element_type=jnp.float32) * scale    # [tb, S, N]
        sc = sc - jnp.max(sc, axis=-1, keepdims=True)
        p = jnp.exp(sc)
        inv = pl.reciprocal(jnp.sum(p, axis=-1, keepdims=True), approx=True)
        p = (p * inv).astype(cdt)                                       # softmax over N

        oh = jnp.einsum('bsk,bkm->bsm', p, vh,
                        preferred_element_type=jnp.float32)             # [tb, S, mv]
        woh = wo[h * dim_mv:(h + 1) * dim_mv, :]                        # [mv, D]
        acc = acc + jnp.dot(oh.reshape(tb * s_rows, dim_mv).astype(cdt), woh,
                            preferred_element_type=jnp.float32)         # [tb*S, D]

    o = acc + bo                                        # output projection (+ bias)

    # --- residual + LayerNorm0 (f32) ---
    r = jnp.tile(seeds, (tb, 1)) + o                    # [tb*S, D]
    mu = jnp.mean(r, axis=-1, keepdims=True)
    var = jnp.mean((r - mu) ** 2, axis=-1, keepdims=True)
    o = (r - mu) * lax.rsqrt(var + eps) * g0 + b0

    # --- o + relu(o) ---
    o = o + jnp.maximum(o, 0.0)

    # --- LayerNorm1 (f32) ---
    mu = jnp.mean(o, axis=-1, keepdims=True)
    var = jnp.mean((o - mu) ** 2, axis=-1, keepdims=True)
    o = (o - mu) * lax.rsqrt(var + eps) * g1 + b1

    out_ref[...] = o.astype(out_ref.dtype)              # lane-dense (tb*S, D) slab store


def multihead_attention_pooling(x, params, *, num_heads, compute_dtype=jnp.bfloat16):
    """x: [B, N, D] (NHC). Returns pooled output [B, S, D]."""
    B, N, D = x.shape
    seeds = params["seeds"].astype(jnp.float32)          # [S, D]
    S = seeds.shape[0]
    dim_mq = D // num_heads
    dim_mv = D // num_heads
    scale = 1.0 / math.sqrt(D)                           # module scales by 1/sqrt(num_dim_q)
    out_dtype = x.dtype

    # batch-invariant q projection hoisted out of the kernel (one tiny XLA matmul)
    q = (jnp.dot(seeds, params["wq"]) + params["bq"]).astype(compute_dtype)   # [S, H*mq]

    # pack the three remaining DxD weights and the 7 tiny (1, D) params
    w = jnp.stack([params["wk"], params["wv"], params["wo"]]).astype(compute_dtype)  # [3,D,D]
    p = jnp.concatenate([params["bk"], params["bv"], params["bo"],
                         params["ln0_g"], params["ln0_b"],
                         params["ln1_g"], params["ln1_b"],
                         jnp.zeros((1, D), jnp.float32)], axis=0).astype(jnp.float32)  # [8,D]

    # Batch blocking: pack tb batches per grid step so tb*N rows feed the MXU
    # (~256 target), and keep the flattened (tb*S, D) output block sublane-aligned.
    sub = 8 // math.gcd(S, 8)
    tb = max(1, min(-(-256 // N), B))
    tb = -(-tb // sub) * sub
    Bp = -(-B // tb) * tb
    if Bp != B:
        x = jnp.concatenate([x, jnp.zeros((Bp - B, N, D), x.dtype)], axis=0)
    xc = x.astype(compute_dtype)

    kernel = functools.partial(
        _mab_pool_kernel,
        num_heads=num_heads, dim_mq=dim_mq, dim_mv=dim_mv, scale=scale, eps=1e-5)

    # NOTE: for production sizes (large N*D on v7x's 64 MiB VMEM), tile N with a second
    # "arbitrary" grid axis + online-softmax accumulators and set vmem_limit_bytes.
    out_flat = pl.pallas_call(
        kernel,
        out_shape=jax.ShapeDtypeStruct((Bp * S, D), out_dtype),
        grid=(Bp // tb,),
        in_specs=[
            pl.BlockSpec((S, D), lambda i: (0, 0)),          # seeds (f32, residual)
            pl.BlockSpec((S, D), lambda i: (0, 0)),          # q = seeds@Wq+bq (cdt)
            pl.BlockSpec((tb, N, D), lambda i: (i, 0, 0)),   # x block (cdt)
            pl.BlockSpec((3, D, D), lambda i: (0, 0, 0)),    # Wk/Wv/Wo stacked (cdt)
            pl.BlockSpec((8, D), lambda i: (0, 0)),          # biases + LN params (f32)
        ],
        out_specs=pl.BlockSpec((tb * S, D), lambda i: (i, 0)),
        compiler_params=pltpu.CompilerParams(
            dimension_semantics=("parallel",)),
    )(seeds, q, xc, w, p)

    return out_flat.reshape(Bp, S, D)[:B]


def init_params(key, num_seeds, num_dims):
    """Deterministic synthetic parameter init (shapes match the PyTorch module)."""
    ks = jax.random.split(key, 6)
    # seeds: xavier-uniform over (num_seeds, num_dims)
    bound = math.sqrt(6.0 / (num_seeds + num_dims))
    seeds = jax.random.uniform(ks[0], (num_seeds, num_dims),
                               minval=-bound, maxval=bound, dtype=jnp.float32)

    def lin(k):
        kw, kb = jax.random.split(k)
        # stored as [in, out] (== PyTorch weight.T), so kernel does x @ W + b
        w = 0.1 * jax.random.normal(kw, (num_dims, num_dims), dtype=jnp.float32)
        b = 0.1 * jax.random.normal(kb, (1, num_dims), dtype=jnp.float32)
        return w, b

    wq, bq = lin(ks[1])
    wk, bk = lin(ks[2])
    wv, bv = lin(ks[3])
    wo, bo = lin(ks[4])
    ones = jnp.ones((1, num_dims), jnp.float32)
    zeros = jnp.zeros((1, num_dims), jnp.float32)
    return dict(seeds=seeds,
                wq=wq, bq=bq, wk=wk, bk=bk, wv=wv, bv=bv, wo=wo, bo=bo,
                ln0_g=ones, ln0_b=zeros, ln1_g=ones, ln1_b=zeros)


if __name__ == "__main__":
    B, N, D = 2, 8, 32          # batch, set size, feature dim
    num_seeds, num_heads = 4, 4

    key = jax.random.PRNGKey(0)
    kx, kp = jax.random.split(key)
    x = jax.random.normal(kx, (B, N, D), dtype=jnp.float32)
    params = init_params(kp, num_seeds, D)

    out = multihead_attention_pooling(x, params, num_heads=num_heads)
    out = jax.block_until_ready(out)
    assert out.shape == (B, num_seeds, D)
    assert bool(jnp.all(jnp.isfinite(out)))
    print("KERNEL_OK")
</pallas_src>

<mosaic_0001>
module attributes {stable_mosaic.version = 11 : i64} {
  func.func @_mab_pool_kernel(%arg0: i32, %arg1: memref<4x32xf32, #tpu.memory_space<vmem>>, %arg2: memref<4x32xbf16, #tpu.memory_space<vmem>>, %arg3: memref<2x8x32xbf16, #tpu.memory_space<vmem>>, %arg4: memref<3x32x32xbf16, #tpu.memory_space<vmem>>, %arg5: memref<8x32xf32, #tpu.memory_space<vmem>>, %arg6: memref<8x32xf32, #tpu.memory_space<vmem>>) attributes {dimension_semantics = [#tpu.dimension_semantics<parallel>], iteration_bounds = array<i64: 1>, scalar_prefetch = 0 : i64, scratch_operands = 0 : i64, tpu.core_type = #tpu.core_type<tc>, window_params = [{pipeline_mode = #tpu.pipeline_mode<synchronous>, transform_indices = @transform_0, window_bounds = array<i64: 4, 32>}, {pipeline_mode = #tpu.pipeline_mode<synchronous>, transform_indices = @transform_1, window_bounds = array<i64: 4, 32>}, {transform_indices = @transform_2, window_bounds = array<i64: 2, 8, 32>}, {pipeline_mode = #tpu.pipeline_mode<synchronous>, transform_indices = @transform_3, window_bounds = array<i64: 3, 32, 32>}, {pipeline_mode = #tpu.pipeline_mode<synchronous>, transform_indices = @transform_4, window_bounds = array<i64: 8, 32>}, {transform_indices = @transform_5, window_bounds = array<i64: 8, 32>}]} {
    %c0 = arith.constant 0 : index
    %c0_0 = arith.constant 0 : index
    %0 = vector.load %arg1[%c0, %c0_0] : memref<4x32xf32, #tpu.memory_space<vmem>>, vector<4x32xf32>
    %c0_1 = arith.constant 0 : index
    %c0_2 = arith.constant 0 : index
    %1 = vector.load %arg2[%c0_1, %c0_2] : memref<4x32xbf16, #tpu.memory_space<vmem>>, vector<4x32xbf16>
    %c0_3 = arith.constant 0 : index
    %c0_4 = arith.constant 0 : index
    %2 = vector.load %arg5[%c0_3, %c0_4] : memref<8x32xf32, #tpu.memory_space<vmem>>, vector<8x32xf32>
    %3 = vector.extract_strided_slice %2 {offsets = [0, 0], sizes = [1, 32], strides = [1, 1]} : vector<8x32xf32> to vector<1x32xf32>
    %4 = vector.extract_strided_slice %2 {offsets = [1, 0], sizes = [1, 32], strides = [1, 1]} : vector<8x32xf32> to vector<1x32xf32>
    %5 = vector.extract_strided_slice %2 {offsets = [2, 0], sizes = [1, 32], strides = [1, 1]} : vector<8x32xf32> to vector<1x32xf32>
    %6 = vector.extract_strided_slice %2 {offsets = [3, 0], sizes = [1, 32], strides = [1, 1]} : vector<8x32xf32> to vector<1x32xf32>
    %7 = vector.extract_strided_slice %2 {offsets = [4, 0], sizes = [1, 32], strides = [1, 1]} : vector<8x32xf32> to vector<1x32xf32>
    %8 = vector.extract_strided_slice %2 {offsets = [5, 0], sizes = [1, 32], strides = [1, 1]} : vector<8x32xf32> to vector<1x32xf32>
    %9 = vector.extract_strided_slice %2 {offsets = [6, 0], sizes = [1, 32], strides = [1, 1]} : vector<8x32xf32> to vector<1x32xf32>
    %c0_5 = arith.constant 0 : index
    %c0_6 = arith.constant 0 : index
    %c0_7 = arith.constant 0 : index
    %10 = vector.load %arg4[%c0_5, %c0_6, %c0_7] : memref<3x32x32xbf16, #tpu.memory_space<vmem>>, vector<1x32x32xbf16>
    %11 = vector.shape_cast %10 : vector<1x32x32xbf16> to vector<32x32xbf16>
    %c1 = arith.constant 1 : index
    %c0_8 = arith.constant 0 : index
    %c0_9 = arith.constant 0 : index
    %12 = vector.load %arg4[%c1, %c0_8, %c0_9] : memref<3x32x32xbf16, #tpu.memory_space<vmem>>, vector<1x32x32xbf16>
    %13 = vector.shape_cast %12 : vector<1x32x32xbf16> to vector<32x32xbf16>
    %c2 = arith.constant 2 : index
    %c0_10 = arith.constant 0 : index
    %c0_11 = arith.constant 0 : index
    %14 = vector.load %arg4[%c2, %c0_10, %c0_11] : memref<3x32x32xbf16, #tpu.memory_space<vmem>>, vector<1x32x32xbf16>
    %15 = vector.shape_cast %14 : vector<1x32x32xbf16> to vector<32x32xbf16>
    %c0_12 = arith.constant 0 : index
    %c0_13 = arith.constant 0 : index
    %c0_14 = arith.constant 0 : index
    %16 = vector.load %arg3[%c0_12, %c0_13, %c0_14] : memref<2x8x32xbf16, #tpu.memory_space<vmem>>, vector<2x8x32xbf16>
    %17 = vector.shape_cast %16 : vector<2x8x32xbf16> to vector<16x32xbf16>
    %cst = arith.constant dense<0.000000e+00> : vector<16x32xf32>
    %18 = tpu.matmul %17, %11, %cst {dimension_numbers = #tpu.dot_dimension_numbers<[1], [0], [0], [1], [0, 0, 1, 1], [], []>} : vector<16x32xbf16>, vector<32x32xbf16>, vector<16x32xf32> -> vector<16x32xf32>
    %19 = vector.broadcast %3 : vector<1x32xf32> to vector<16x32xf32>
    %20 = arith.addf %18, %19 : vector<16x32xf32>
    %21 = arith.truncf %20 : vector<16x32xf32> to vector<16x32xbf16>
    %cst_15 = arith.constant dense<0.000000e+00> : vector<16x32xf32>
    %22 = tpu.matmul %17, %13, %cst_15 {dimension_numbers = #tpu.dot_dimension_numbers<[1], [0], [0], [1], [0, 0, 1, 1], [], []>} : vector<16x32xbf16>, vector<32x32xbf16>, vector<16x32xf32> -> vector<16x32xf32>
    %23 = vector.broadcast %4 : vector<1x32xf32> to vector<16x32xf32>
    %24 = arith.addf %22, %23 : vector<16x32xf32>
    %25 = arith.truncf %24 : vector<16x32xf32> to vector<16x32xbf16>
    %26 = vector.shape_cast %21 : vector<16x32xbf16> to vector<2x8x32xbf16>
    %27 = vector.shape_cast %25 : vector<16x32xbf16> to vector<2x8x32xbf16>
    %28 = vector.shape_cast %1 : vector<4x32xbf16> to vector<1x4x32xbf16>
    %29 = vector.shape_cast %28 : vector<1x4x32xbf16> to vector<1x4x32xbf16>
    %30 = vector.broadcast %29 : vector<1x4x32xbf16> to vector<2x4x32xbf16>
    %cst_16 = arith.constant 0.000000e+00 : f32
    %31 = vector.broadcast %cst_16 : f32 to vector<8x32xf32>
    %32 = vector.extract_strided_slice %30 {offsets = [0, 0, 0], sizes = [2, 4, 8], strides = [1, 1, 1]} : vector<2x4x32xbf16> to vector<2x4x8xbf16>
    %33 = vector.extract_strided_slice %26 {offsets = [0, 0, 0], sizes = [2, 8, 8], strides = [1, 1, 1]} : vector<2x8x32xbf16> to vector<2x8x8xbf16>
    %34 = vector.extract_strided_slice %27 {offsets = [0, 0, 0], sizes = [2, 8, 8], strides = [1, 1, 1]} : vector<2x8x32xbf16> to vector<2x8x8xbf16>
    "tpu.trace_start"() <{level = 10 : i32, message = "bsq,bkq->bsk"}> : () -> ()
    %cst_17 = arith.constant dense<0.000000e+00> : vector<2x4x8xf32>
    %35 = tpu.matmul %32, %33, %cst_17 {dimension_numbers = #tpu.dot_dimension_numbers<[2], [2], [1], [1], [0, 0, 0, 1, 1, 1], [0], [0]>} : vector<2x4x8xbf16>, vector<2x8x8xbf16>, vector<2x4x8xf32> -> vector<2x4x8xf32>
    "tpu.trace_stop"() : () -> ()
    %cst_18 = arith.constant 0.176776692 : f32
    %36 = vector.broadcast %cst_18 : f32 to vector<2x4x8xf32>
    %37 = arith.mulf %35, %36 : vector<2x4x8xf32>
    %cst_19 = arith.constant dense<0xFF800000> : vector<2x4xf32>
    %38 = vector.multi_reduction <maximumf>, %37, %cst_19 [2] : vector<2x4x8xf32> to vector<2x4xf32>
    %39 = vector.shape_cast %38 : vector<2x4xf32> to vector<2x4x1xf32>
    %40 = vector.broadcast %39 : vector<2x4x1xf32> to vector<2x4x8xf32>
    %41 = arith.subf %37, %40 : vector<2x4x8xf32>
    %42 = math.exp %41 : vector<2x4x8xf32>
    %cst_20 = arith.constant dense<0.000000e+00> : vector<2x4xf32>
    %43 = vector.multi_reduction <add>, %42, %cst_20 [2] : vector<2x4x8xf32> to vector<2x4xf32>
    %44 = vector.shape_cast %43 : vector<2x4xf32> to vector<2x4x1xf32>
    %45 = tpu.reciprocal %44 {approx = true} : vector<2x4x1xf32> -> vector<2x4x1xf32>
    %46 = vector.broadcast %45 : vector<2x4x1xf32> to vector<2x4x8xf32>
    %47 = arith.mulf %42, %46 : vector<2x4x8xf32>
    %48 = arith.truncf %47 : vector<2x4x8xf32> to vector<2x4x8xbf16>
    "tpu.trace_start"() <{level = 10 : i32, message = "bsk,bkm->bsm"}> : () -> ()
    %cst_21 = arith.constant dense<0.000000e+00> : vector<2x4x8xf32>
    %49 = tpu.matmul %48, %34, %cst_21 {dimension_numbers = #tpu.dot_dimension_numbers<[2], [1], [1], [2], [0, 0, 0, 1, 1, 2], [0], [0]>} : vector<2x4x8xbf16>, vector<2x8x8xbf16>, vector<2x4x8xf32> -> vector<2x4x8xf32>
    "tpu.trace_stop"() : () -> ()
    %50 = vector.extract_strided_slice %15 {offsets = [0, 0], sizes = [8, 32], strides = [1, 1]} : vector<32x32xbf16> to vector<8x32xbf16>
    %51 = vector.shape_cast %49 : vector<2x4x8xf32> to vector<8x8xf32>
    %52 = arith.truncf %51 : vector<8x8xf32> to vector<8x8xbf16>
    %cst_22 = arith.constant dense<0.000000e+00> : vector<8x32xf32>
    %53 = tpu.matmul %52, %50, %cst_22 {dimension_numbers = #tpu.dot_dimension_numbers<[1], [0], [0], [1], [0, 0, 1, 1], [], []>} : vector<8x8xbf16>, vector<8x32xbf16>, vector<8x32xf32> -> vector<8x32xf32>
    %54 = arith.addf %31, %53 : vector<8x32xf32>
    %55 = vector.extract_strided_slice %30 {offsets = [0, 0, 8], sizes = [2, 4, 8], strides = [1, 1, 1]} : vector<2x4x32xbf16> to vector<2x4x8xbf16>
    %56 = vector.extract_strided_slice %26 {offsets = [0, 0, 8], sizes = [2, 8, 8], strides = [1, 1, 1]} : vector<2x8x32xbf16> to vector<2x8x8xbf16>
    %57 = vector.extract_strided_slice %27 {offsets = [0, 0, 8], sizes = [2, 8, 8], strides = [1, 1, 1]} : vector<2x8x32xbf16> to vector<2x8x8xbf16>
    "tpu.trace_start"() <{level = 10 : i32, message = "bsq,bkq->bsk"}> : () -> ()
    %cst_23 = arith.constant dense<0.000000e+00> : vector<2x4x8xf32>
    %58 = tpu.matmul %55, %56, %cst_23 {dimension_numbers = #tpu.dot_dimension_numbers<[2], [2], [1], [1], [0, 0, 0, 1, 1, 1], [0], [0]>} : vector<2x4x8xbf16>, vector<2x8x8xbf16>, vector<2x4x8xf32> -> vector<2x4x8xf32>
    "tpu.trace_stop"() : () -> ()
    %cst_24 = arith.constant 0.176776692 : f32
    %59 = vector.broadcast %cst_24 : f32 to vector<2x4x8xf32>
    %60 = arith.mulf %58, %59 : vector<2x4x8xf32>
    %cst_25 = arith.constant dense<0xFF800000> : vector<2x4xf32>
    %61 = vector.multi_reduction <maximumf>, %60, %cst_25 [2] : vector<2x4x8xf32> to vector<2x4xf32>
    %62 = vector.shape_cast %61 : vector<2x4xf32> to vector<2x4x1xf32>
    %63 = vector.broadcast %62 : vector<2x4x1xf32> to vector<2x4x8xf32>
    %64 = arith.subf %60, %63 : vector<2x4x8xf32>
    %65 = math.exp %64 : vector<2x4x8xf32>
    %cst_26 = arith.constant dense<0.000000e+00> : vector<2x4xf32>
    %66 = vector.multi_reduction <add>, %65, %cst_26 [2] : vector<2x4x8xf32> to vector<2x4xf32>
    %67 = vector.shape_cast %66 : vector<2x4xf32> to vector<2x4x1xf32>
    %68 = tpu.reciprocal %67 {approx = true} : vector<2x4x1xf32> -> vector<2x4x1xf32>
    %69 = vector.broadcast %68 : vector<2x4x1xf32> to vector<2x4x8xf32>
    %70 = arith.mulf %65, %69 : vector<2x4x8xf32>
    %71 = arith.truncf %70 : vector<2x4x8xf32> to vector<2x4x8xbf16>
    "tpu.trace_start"() <{level = 10 : i32, message = "bsk,bkm->bsm"}> : () -> ()
    %cst_27 = arith.constant dense<0.000000e+00> : vector<2x4x8xf32>
    %72 = tpu.matmul %71, %57, %cst_27 {dimension_numbers = #tpu.dot_dimension_numbers<[2], [1], [1], [2], [0, 0, 0, 1, 1, 2], [0], [0]>} : vector<2x4x8xbf16>, vector<2x8x8xbf16>, vector<2x4x8xf32> -> vector<2x4x8xf32>
    "tpu.trace_stop"() : () -> ()
    %73 = vector.extract_strided_slice %15 {offsets = [8, 0], sizes = [8, 32], strides = [1, 1]} : vector<32x32xbf16> to vector<8x32xbf16>
    %74 = vector.shape_cast %72 : vector<2x4x8xf32> to vector<8x8xf32>
    %75 = arith.truncf %74 : vector<8x8xf32> to vector<8x8xbf16>
    %cst_28 = arith.constant dense<0.000000e+00> : vector<8x32xf32>
    %76 = tpu.matmul %75, %73, %cst_28 {dimension_numbers = #tpu.dot_dimension_numbers<[1], [0], [0], [1], [0, 0, 1, 1], [], []>} : vector<8x8xbf16>, vector<8x32xbf16>, vector<8x32xf32> -> vector<8x32xf32>
    %77 = arith.addf %54, %76 : vector<8x32xf32>
    %78 = vector.extract_strided_slice %30 {offsets = [0, 0, 16], sizes = [2, 4, 8], strides = [1, 1, 1]} : vector<2x4x32xbf16> to vector<2x4x8xbf16>
    %79 = vector.extract_strided_slice %26 {offsets = [0, 0, 16], sizes = [2, 8, 8], strides = [1, 1, 1]} : vector<2x8x32xbf16> to vector<2x8x8xbf16>
    %80 = vector.extract_strided_slice %27 {offsets = [0, 0, 16], sizes = [2, 8, 8], strides = [1, 1, 1]} : vector<2x8x32xbf16> to vector<2x8x8xbf16>
    "tpu.trace_start"() <{level = 10 : i32, message = "bsq,bkq->bsk"}> : () -> ()
    %cst_29 = arith.constant dense<0.000000e+00> : vector<2x4x8xf32>
    %81 = tpu.matmul %78, %79, %cst_29 {dimension_numbers = #tpu.dot_dimension_numbers<[2], [2], [1], [1], [0, 0, 0, 1, 1, 1], [0], [0]>} : vector<2x4x8xbf16>, vector<2x8x8xbf16>, vector<2x4x8xf32> -> vector<2x4x8xf32>
    "tpu.trace_stop"() : () -> ()
    %cst_30 = arith.constant 0.176776692 : f32
    %82 = vector.broadcast %cst_30 : f32 to vector<2x4x8xf32>
    %83 = arith.mulf %81, %82 : vector<2x4x8xf32>
    %cst_31 = arith.constant dense<0xFF800000> : vector<2x4xf32>
    %84 = vector.multi_reduction <maximumf>, %83, %cst_31 [2] : vector<2x4x8xf32> to vector<2x4xf32>
    %85 = vector.shape_cast %84 : vector<2x4xf32> to vector<2x4x1xf32>
    %86 = vector.broadcast %85 : vector<2x4x1xf32> to vector<2x4x8xf32>
    %87 = arith.subf %83, %86 : vector<2x4x8xf32>
    %88 = math.exp %87 : vector<2x4x8xf32>
    %cst_32 = arith.constant dense<0.000000e+00> : vector<2x4xf32>
    %89 = vector.multi_reduction <add>, %88, %cst_32 [2] : vector<2x4x8xf32> to vector<2x4xf32>
    %90 = vector.shape_cast %89 : vector<2x4xf32> to vector<2x4x1xf32>
    %91 = tpu.reciprocal %90 {approx = true} : vector<2x4x1xf32> -> vector<2x4x1xf32>
    %92 = vector.broadcast %91 : vector<2x4x1xf32> to vector<2x4x8xf32>
    %93 = arith.mulf %88, %92 : vector<2x4x8xf32>
    %94 = arith.truncf %93 : vector<2x4x8xf32> to vector<2x4x8xbf16>
    "tpu.trace_start"() <{level = 10 : i32, message = "bsk,bkm->bsm"}> : () -> ()
    %cst_33 = arith.constant dense<0.000000e+00> : vector<2x4x8xf32>
    %95 = tpu.matmul %94, %80, %cst_33 {dimension_numbers = #tpu.dot_dimension_numbers<[2], [1], [1], [2], [0, 0, 0, 1, 1, 2], [0], [0]>} : vector<2x4x8xbf16>, vector<2x8x8xbf16>, vector<2x4x8xf32> -> vector<2x4x8xf32>
    "tpu.trace_stop"() : () -> ()
    %96 = vector.extract_strided_slice %15 {offsets = [16, 0], sizes = [8, 32], strides = [1, 1]} : vector<32x32xbf16> to vector<8x32xbf16>
    %97 = vector.shape_cast %95 : vector<2x4x8xf32> to vector<8x8xf32>
    %98 = arith.truncf %97 : vector<8x8xf32> to vector<8x8xbf16>
    %cst_34 = arith.constant dense<0.000000e+00> : vector<8x32xf32>
    %99 = tpu.matmul %98, %96, %cst_34 {dimension_numbers = #tpu.dot_dimension_numbers<[1], [0], [0], [1], [0, 0, 1, 1], [], []>} : vector<8x8xbf16>, vector<8x32xbf16>, vector<8x32xf32> -> vector<8x32xf32>
    %100 = arith.addf %77, %99 : vector<8x32xf32>
    %101 = vector.extract_strided_slice %30 {offsets = [0, 0, 24], sizes = [2, 4, 8], strides = [1, 1, 1]} : vector<2x4x32xbf16> to vector<2x4x8xbf16>
    %102 = vector.extract_strided_slice %26 {offsets = [0, 0, 24], sizes = [2, 8, 8], strides = [1, 1, 1]} : vector<2x8x32xbf16> to vector<2x8x8xbf16>
    %103 = vector.extract_strided_slice %27 {offsets = [0, 0, 24], sizes = [2, 8, 8], strides = [1, 1, 1]} : vector<2x8x32xbf16> to vector<2x8x8xbf16>
    "tpu.trace_start"() <{level = 10 : i32, message = "bsq,bkq->bsk"}> : () -> ()
    %cst_35 = arith.constant dense<0.000000e+00> : vector<2x4x8xf32>
    %104 = tpu.matmul %101, %102, %cst_35 {dimension_numbers = #tpu.dot_dimension_numbers<[2], [2], [1], [1], [0, 0, 0, 1, 1, 1], [0], [0]>} : vector<2x4x8xbf16>, vector<2x8x8xbf16>, vector<2x4x8xf32> -> vector<2x4x8xf32>
    "tpu.trace_stop"() : () -> ()
    %cst_36 = arith.constant 0.176776692 : f32
    %105 = vector.broadcast %cst_36 : f32 to vector<2x4x8xf32>
    %106 = arith.mulf %104, %105 : vector<2x4x8xf32>
    %cst_37 = arith.constant dense<0xFF800000> : vector<2x4xf32>
    %107 = vector.multi_reduction <maximumf>, %106, %cst_37 [2] : vector<2x4x8xf32> to vector<2x4xf32>
    %108 = vector.shape_cast %107 : vector<2x4xf32> to vector<2x4x1xf32>
    %109 = vector.broadcast %108 : vector<2x4x1xf32> to vector<2x4x8xf32>
    %110 = arith.subf %106, %109 : vector<2x4x8xf32>
    %111 = math.exp %110 : vector<2x4x8xf32>
    %cst_38 = arith.constant dense<0.000000e+00> : vector<2x4xf32>
    %112 = vector.multi_reduction <add>, %111, %cst_38 [2] : vector<2x4x8xf32> to vector<2x4xf32>
    %113 = vector.shape_cast %112 : vector<2x4xf32> to vector<2x4x1xf32>
    %114 = tpu.reciprocal %113 {approx = true} : vector<2x4x1xf32> -> vector<2x4x1xf32>
    %115 = vector.broadcast %114 : vector<2x4x1xf32> to vector<2x4x8xf32>
    %116 = arith.mulf %111, %115 : vector<2x4x8xf32>
    %117 = arith.truncf %116 : vector<2x4x8xf32> to vector<2x4x8xbf16>
    "tpu.trace_start"() <{level = 10 : i32, message = "bsk,bkm->bsm"}> : () -> ()
    %cst_39 = arith.constant dense<0.000000e+00> : vector<2x4x8xf32>
    %118 = tpu.matmul %117, %103, %cst_39 {dimension_numbers = #tpu.dot_dimension_numbers<[2], [1], [1], [2], [0, 0, 0, 1, 1, 2], [0], [0]>} : vector<2x4x8xbf16>, vector<2x8x8xbf16>, vector<2x4x8xf32> -> vector<2x4x8xf32>
    "tpu.trace_stop"() : () -> ()
    %119 = vector.extract_strided_slice %15 {offsets = [24, 0], sizes = [8, 32], strides = [1, 1]} : vector<32x32xbf16> to vector<8x32xbf16>
    %120 = vector.shape_cast %118 : vector<2x4x8xf32> to vector<8x8xf32>
    %121 = arith.truncf %120 : vector<8x8xf32> to vector<8x8xbf16>
    %cst_40 = arith.constant dense<0.000000e+00> : vector<8x32xf32>
    %122 = tpu.matmul %121, %119, %cst_40 {dimension_numbers = #tpu.dot_dimension_numbers<[1], [0], [0], [1], [0, 0, 1, 1], [], []>} : vector<8x8xbf16>, vector<8x32xbf16>, vector<8x32xf32> -> vector<8x32xf32>
    %123 = arith.addf %100, %122 : vector<8x32xf32>
    %124 = vector.broadcast %5 : vector<1x32xf32> to vector<8x32xf32>
    %125 = arith.addf %123, %124 : vector<8x32xf32>
    %126 = tpu.concatenate %0, %0 in 0 : vector<4x32xf32>, vector<4x32xf32> -> vector<8x32xf32>
    %127 = arith.addf %126, %125 : vector<8x32xf32>
    %cst_41 = arith.constant dense<0.000000e+00> : vector<8xf32>
    %128 = vector.multi_reduction <add>, %127, %cst_41 [1] : vector<8x32xf32> to vector<8xf32>
    %129 = vector.shape_cast %128 : vector<8xf32> to vector<8x1xf32>
    %cst_42 = arith.constant 3.200000e+01 : f32
    %130 = vector.broadcast %cst_42 : f32 to vector<8x1xf32>
    %131 = arith.divf %129, %130 : vector<8x1xf32>
    %132 = vector.broadcast %131 : vector<8x1xf32> to vector<8x32xf32>
    %133 = arith.subf %127, %132 : vector<8x32xf32>
    %134 = arith.mulf %133, %133 : vector<8x32xf32>
    %cst_43 = arith.constant dense<0.000000e+00> : vector<8xf32>
    %135 = vector.multi_reduction <add>, %134, %cst_43 [1] : vector<8x32xf32> to vector<8xf32>
    %136 = vector.shape_cast %135 : vector<8xf32> to vector<8x1xf32>
    %cst_44 = arith.constant 3.200000e+01 : f32
    %137 = vector.broadcast %cst_44 : f32 to vector<8x1xf32>
    %138 = arith.divf %136, %137 : vector<8x1xf32>
    %139 = vector.broadcast %131 : vector<8x1xf32> to vector<8x32xf32>
    %140 = arith.subf %127, %139 : vector<8x32xf32>
    %cst_45 = arith.constant 9.99999974E-6 : f32
    %141 = vector.broadcast %cst_45 : f32 to vector<8x1xf32>
    %142 = arith.addf %138, %141 : vector<8x1xf32>
    %143 = math.rsqrt %142 : vector<8x1xf32>
    %144 = vector.broadcast %143 : vector<8x1xf32> to vector<8x32xf32>
    %145 = arith.mulf %140, %144 : vector<8x32xf32>
    %146 = vector.broadcast %6 : vector<1x32xf32> to vector<8x32xf32>
    %147 = arith.mulf %145, %146 : vector<8x32xf32>
    %148 = vector.broadcast %7 : vector<1x32xf32> to vector<8x32xf32>
    %149 = arith.addf %147, %148 : vector<8x32xf32>
    %cst_46 = arith.constant 0.000000e+00 : f32
    %150 = vector.broadcast %cst_46 : f32 to vector<8x32xf32>
    %151 = arith.maximumf %149, %150 : vector<8x32xf32>
    %152 = arith.addf %149, %151 : vector<8x32xf32>
    %cst_47 = arith.constant dense<0.000000e+00> : vector<8xf32>
    %153 = vector.multi_reduction <add>, %152, %cst_47 [1] : vector<8x32xf32> to vector<8xf32>
    %154 = vector.shape_cast %153 : vector<8xf32> to vector<8x1xf32>
    %cst_48 = arith.constant 3.200000e+01 : f32
    %155 = vector.broadcast %cst_48 : f32 to vector<8x1xf32>
    %156 = arith.divf %154, %155 : vector<8x1xf32>
    %157 = vector.broadcast %156 : vector<8x1xf32> to vector<8x32xf32>
    %158 = arith.subf %152, %157 : vector<8x32xf32>
    %159 = arith.mulf %158, %158 : vector<8x32xf32>
    %cst_49 = arith.constant dense<0.000000e+00> : vector<8xf32>
    %160 = vector.multi_reduction <add>, %159, %cst_49 [1] : vector<8x32xf32> to vector<8xf32>
    %161 = vector.shape_cast %160 : vector<8xf32> to vector<8x1xf32>
    %cst_50 = arith.constant 3.200000e+01 : f32
    %162 = vector.broadcast %cst_50 : f32 to vector<8x1xf32>
    %163 = arith.divf %161, %162 : vector<8x1xf32>
    %164 = vector.broadcast %156 : vector<8x1xf32> to vector<8x32xf32>
    %165 = arith.subf %152, %164 : vector<8x32xf32>
    %cst_51 = arith.constant 9.99999974E-6 : f32
    %166 = vector.broadcast %cst_51 : f32 to vector<8x1xf32>
    %167 = arith.addf %163, %166 : vector<8x1xf32>
    %168 = math.rsqrt %167 : vector<8x1xf32>
    %169 = vector.broadcast %168 : vector<8x1xf32> to vector<8x32xf32>
    %170 = arith.mulf %165, %169 : vector<8x32xf32>
    %171 = vector.broadcast %8 : vector<1x32xf32> to vector<8x32xf32>
    %172 = arith.mulf %170, %171 : vector<8x32xf32>
    %173 = vector.broadcast %9 : vector<1x32xf32> to vector<8x32xf32>
    %174 = arith.addf %172, %173 : vector<8x32xf32>
    %c0_52 = arith.constant 0 : index
    %c0_53 = arith.constant 0 : index
    %175 = vector.load %arg6[%c0_52, %c0_53] : memref<8x32xf32, #tpu.memory_space<vmem>>, vector<8x32xf32>
    tpu.vector_store %arg6[%c0_52, %c0_53], %174 {strides = array<i32>} : memref<8x32xf32, #tpu.memory_space<vmem>>, vector<8x32xf32>,
    return
  }
  func.func @transform_0(%arg0: i32) -> (i32, i32) {
    %c0_i32 = arith.constant 0 : i32
    %c0_i32_0 = arith.constant 0 : i32
    %c0_i32_1 = arith.constant 0 : i32
    return %c0_i32, %c0_i32_0 : i32, i32
  }
  func.func @transform_1(%arg0: i32) -> (i32, i32) {
    %c0_i32 = arith.constant 0 : i32
    %c0_i32_0 = arith.constant 0 : i32
    %c0_i32_1 = arith.constant 0 : i32
    return %c0_i32, %c0_i32_0 : i32, i32
  }
  func.func @transform_2(%arg0: i32) -> (i32, i32, i32) {
    %c0_i32 = arith.constant 0 : i32
    %c0_i32_0 = arith.constant 0 : i32
    %c0_i32_1 = arith.constant 0 : i32
    return %arg0, %c0_i32, %c0_i32_0 : i32, i32, i32
  }
  func.func @transform_3(%arg0: i32) -> (i32, i32, i32) {
    %c0_i32 = arith.constant 0 : i32
    %c0_i32_0 = arith.constant 0 : i32
    %c0_i32_1 = arith.constant 0 : i32
    %c0_i32_2 = arith.constant 0 : i32
    return %c0_i32, %c0_i32_0, %c0_i32_1 : i32, i32, i32
  }
  func.func @transform_4(%arg0: i32) -> (i32, i32) {
    %c0_i32 = arith.constant 0 : i32
    %c0_i32_0 = arith.constant 0 : i32
    %c0_i32_1 = arith.constant 0 : i32
    return %c0_i32, %c0_i32_0 : i32, i32
  }
  func.func @transform_5(%arg0: i32) -> (i32, i32) {
    %c0_i32 = arith.constant 0 : i32
    %c0_i32_0 = arith.constant 0 : i32
    return %arg0, %c0_i32 : i32, i32
  }
}

</mosaic_0001>

<llo_original>
// kernel: tpu_custom_call.1
$region0: #{tpu_custom_call.1}
  #allocation0 [shape = 'u32[]', space=smem, size = 0x4, offset = 0x4, fixed_abs, tag = 'smem constant byte address 0x4 - core index']
  #allocation1 [shape = 'u32[144,128]{1,0:T(1,128)}', space=vmem, size = 0x12000, scoped, tag = 'internal scratch']
  %s0 = inlined_call_operand.hbm [shape: f32[4,32], index: 0, kind: input, shape index: {}]
  %s1 = inlined_call_operand.vmem [shape: bf16[4,32], index: 1, kind: input, shape index: {}]
  %s2 = inlined_call_operand.hbm [shape: bf16[2,8,32], index: 2, kind: input, shape index: {}]
  %s3 = inlined_call_operand.hbm [shape: bf16[3,32,32], index: 3, kind: input, shape index: {}]
  %s4 = inlined_call_operand.vmem [shape: f32[8,32], index: 4, kind: input, shape index: {}]
  %s5 = inlined_call_operand.hbm [shape: f32[8,32], index: 5, kind: output, shape index: {}]
  %s6 = sld [smem:[#allocation0]]
  $region42: #{tpu_custom_call.1} parent=0
    _
  %s8 = ssub.s32 1, %s6
  %s9 = scalar_select 0, %s8, %s6
  $region1: #{tpu_custom_call.1} parent=0
    #allocation2 [shape = 'u8[2048]{0}', space=vmem, size = 0x800, scoped, tag = 'input window, operand 0, single buffered']
    #allocation3 [shape = 's32[1]{0}', space=sflag, size = 0x4, scoped, tag = 'scoped memory for tpu_custom_call.1']
    #allocation4 [shape = 's32[1]{0}', space=sflag, size = 0x4, scoped, tag = 'scoped memory for tpu_custom_call.1']
    #allocation5 [shape = 'u8[4096]{0}', space=vmem, size = 0x1000, scoped, tag = 'input window, operand 2, single buffered']
    #allocation6 [shape = 's32[1]{0}', space=sflag, size = 0x4, scoped, tag = 'scoped memory for tpu_custom_call.1']
    #allocation7 [shape = 'u8[24576]{0}', space=vmem, size = 0x6000, scoped, tag = 'input window, operand 3, single buffered']
    #allocation8 [shape = 'u8[4096]{0}', space=vmem, size = 0x1000, scoped, tag = 'output window, operand 0, single buffered']
    %10 = vsyncpa [#allocation3], 0
    %11 = vsyncpa [#allocation6], 0
    %12 = vsyncpa [#allocation4], 0
    // Predicated region
    $region2: #{tpu_custom_call.1} parent=1 // pred_check
      _
    $region3: #{tpu_custom_call.1} parent=1 // pred_check_branch
      %14 = sbr.rel (0) target = $region5
    $region4: #{tpu_custom_call.1} parent=1 // pred_region
      %s16 = ssub.s32 64, 64
      %17 = vsyncadd [#allocation3], %s16
      %s19 = sshll.u32 [#allocation2], 4
      %s20 = int_to_ptr.vmem [resolvable:$true] %s19
      %22 = dma.hbm_to_vmem [thread:$0]  %s0, 64, %s20, [#allocation3]
    $region5: #{tpu_custom_call.1} parent=1 // pred_fallthru
      _
    // Predicated region
    $region6: #{tpu_custom_call.1} parent=1 // pred_check
      _
    $region7: #{tpu_custom_call.1} parent=1 // pred_check_branch
      %24 = sbr.rel (0) target = $region9
    $region8: #{tpu_custom_call.1} parent=1 // pred_region
      _
    $region9: #{tpu_custom_call.1} parent=1 // pred_fallthru
      _
    // Predicated region
    $region10: #{tpu_custom_call.1} parent=1 // pred_check
      _
    $region11: #{tpu_custom_call.1} parent=1 // pred_check_branch
      %26 = sbr.rel (0) target = $region13
    $region12: #{tpu_custom_call.1} parent=1 // pred_region
      %s28 = ssub.s32 128, 128
      %29 = vsyncadd [#allocation6], %s28
      %s30 = sshll.u32 [#allocation5], 4
      %s31 = int_to_ptr.vmem [resolvable:$true] %s30
      %36 = dma.hbm_to_vmem [thread:$0]  %s2, 128, %s31, [#allocation6], 64, 64, 4
    $region13: #{tpu_custom_call.1} parent=1 // pred_fallthru
      _
    // Predicated region
    $region14: #{tpu_custom_call.1} parent=1 // pred_check
      _
    $region15: #{tpu_custom_call.1} parent=1 // pred_check_branch
      %38 = sbr.rel (0) target = $region17
    $region16: #{tpu_custom_call.1} parent=1 // pred_region
      %s40 = ssub.s32 768, 768
      %41 = vsyncadd [#allocation6], %s40
      %s42 = sshll.u32 [#allocation7], 4
      %s43 = int_to_ptr.vmem [resolvable:$true] %s42
      %48 = dma.hbm_to_vmem [thread:$0]  %s3, 768, %s43, [#allocation6], 64, 64, 4
    $region17: #{tpu_custom_call.1} parent=1 // pred_fallthru
      _
    // Predicated region
    $region18: #{tpu_custom_call.1} parent=1 // pred_check
      _
    $region19: #{tpu_custom_call.1} parent=1 // pred_check_branch
      %50 = sbr.rel (0) target = $region21
    $region20: #{tpu_custom_call.1} parent=1 // pred_region
      _
    $region21: #{tpu_custom_call.1} parent=1 // pred_fallthru
      _
    // Predicated region
    $region22: #{tpu_custom_call.1} parent=1 // pred_check
      _
    $region23: #{tpu_custom_call.1} parent=1 // pred_check_branch
      %52 = sbr.rel (0) target = $region25
    $region24: #{tpu_custom_call.1} parent=1 // pred_region
      %53 = dma.done [#allocation3], 64
    $region25: #{tpu_custom_call.1} parent=1 // pred_fallthru
      _
    // Predicated region
    $region26: #{tpu_custom_call.1} parent=1 // pred_check
      _
    $region27: #{tpu_custom_call.1} parent=1 // pred_check_branch
      %55 = sbr.rel (0) target = $region29
    $region28: #{tpu_custom_call.1} parent=1 // pred_region
      %56 = dma.done [#allocation6], 128
    $region29: #{tpu_custom_call.1} parent=1 // pred_fallthru
      _
    // Predicated region
    $region30: #{tpu_custom_call.1} parent=1 // pred_check
      _
    $region31: #{tpu_custom_call.1} parent=1 // pred_check_branch
      %58 = sbr.rel (0) target = $region33
    $region32: #{tpu_custom_call.1} parent=1 // pred_region
      %59 = dma.done [#allocation6], 768
    $region33: #{tpu_custom_call.1} parent=1 // pred_fallthru
      _
    %v61 = vld [vmem:[#allocation2] sm:$0xf]
    %v62 = vld [vmem:[%s1] sm:$0x3]
    %v63 = vld [vmem:[%s4] sm:$0xff]
    %v64 = vld [vmem:[#allocation7] sm:$0xf]
    %v65 = vld [vmem:[#allocation7 + $0x4] sm:$0xf]
    %v66 = vld [vmem:[#allocation7 + $0x8] sm:$0xf]
    %v67 = vld [vmem:[#allocation7 + $0xc] sm:$0xf]
    %s68 = scalar_lea.vmem [#allocation7], 16
    %v69 = vld [vmem:[%s68] sm:$0xf]
    %v70 = vld [vmem:[%s68 + $0x4] sm:$0xf]
    %v71 = vld [vmem:[%s68 + $0x8] sm:$0xf]
    %v72 = vld [vmem:[%s68 + $0xc] sm:$0xf]
    %s73 = scalar_lea.vmem [#allocation7], 32
    %v74 = vld [vmem:[%s73] sm:$0xf]
    %v75 = vld [vmem:[%s73 + $0x4] sm:$0xf]
    %v76 = vld [vmem:[%s73 + $0x8] sm:$0xf]
    %v77 = vld [vmem:[%s73 + $0xc] sm:$0xf]
    %v78 = vld [vmem:[#allocation5] sm:$0xf]
    %v79 = vld [vmem:[#allocation5 + $0x4] sm:$0xf]
    %v80 = vlaneseq
    %v81 = vshrl.u32 %v80, 7
    %v82 = vsub.s32 0, %v81
    %v83 = vrot.slane %v63, %v82
    %v86 = vunpack.c.l.b16 %v78
    %v87 = vunpack.c.l.b16 %v79
    %v88 = vpack.c.b16 %v87, %v86
    %v93 = vunpack.c.l.b16 %v64
    %v94 = vunpack.c.l.b16 %v65
    %v95 = vunpack.c.l.b16 %v66
    %v96 = vunpack.c.l.b16 %v67
    %v97 = vpack.c.b16 %v94, %v93
    %v98 = vpack.c.b16 %v96, %v95
    %vm101 = vcmask 261120
    %v103 = vsel %vm101, %v88, 0
    %105 = vmatprep.subr.bf16.mxu0 0
    %106 = vmatpush1.bf16.msra.mxu0 %v97
    %107 = vmatprep.subr.bf16.mxu0 0
    %108 = vmatpush1.bf16.msra.mxu0 %v98
    %109 = vmatprep.subr.bf16.mxu0 0
    %110 = vmatpush1.bf16.msra.mxu0 0
    %111 = vmatprep.subr.bf16.mxu0 0
    %112 = vmatpush1.bf16.msra.mxu0 0
    %113 = vmatprep.subr.bf16.mxu0 0
    %114 = vmatpush1.bf16.msra.mxu0 0
    %115 = vmatprep.subr.bf16.mxu0 0
    %116 = vmatpush1.bf16.msra.mxu0 0
    %117 = vmatprep.subr.bf16.mxu0 0
    %118 = vmatpush1.bf16.msra.mxu0 0
    %119 = vmatprep.subr.bf16.mxu0 0
    %120 = vmatpush1.bf16.msra.mxu0 0
    %121 = vmatprep.subr.bf16.mxu0 0
    %122 = vmatpush1.bf16.msra.mxu0 0
    %123 = vmatprep.subr.bf16.mxu0 0
    %124 = vmatpush1.bf16.msra.mxu0 0
    %125 = vmatprep.subr.bf16.mxu0 0
    %126 = vmatpush1.bf16.msra.mxu0 0
    %127 = vmatprep.subr.bf16.mxu0 0
    %128 = vmatpush1.bf16.msra.mxu0 0
    %129 = vmatprep.subr.bf16.mxu0 0
    %130 = vmatpush1.bf16.msra.mxu0 0
    %131 = vmatprep.subr.bf16.mxu0 0
    %132 = vmatpush1.bf16.msra.mxu0 0
    %133 = vmatprep.subr.bf16.mxu0 0
    %134 = vmatpush1.bf16.msra.mxu0 0
    %135 = vmatprep.subr.bf16.mxu0 0
    %136 = vmatpush1.bf16.msra.mxu0 0
    %137 = vmatprep.mubr.bf16.mxu0 0
    %138 = vmatmul.mubr.bf16.gmra.mrb[0].mxu0 %v103
    %v139 = vpop.f32.mrb[0].mxu0
    %v140 = vadd.f32 %v83, %v139
    %v141 = vpop.f32.mrb[0].mxu0
    %v142 = vpop.f32.mrb[0].mxu0
    %v143 = vadd.f32 %v83, %v142
    %v144 = vpop.f32.mrb[0].mxu0
    %145 = vdwg.mxu0
    %v146 = vpack.c.bf16 %v143, %v140
    %v147 = vlaneseq
    %v148 = vshrl.u32 %v147, 7
    %v149 = vsub.s32 1, %v148
    %v150 = vrot.slane %v63, %v149
    %v155 = vunpack.c.l.b16 %v69
    %v156 = vunpack.c.l.b16 %v70
    %v157 = vunpack.c.l.b16 %v71
    %v158 = vunpack.c.l.b16 %v72
    %v159 = vpack.c.b16 %v156, %v155
    %v160 = vpack.c.b16 %v158, %v157
    %163 = vmatprep.subr.bf16.mxu0 0
    %164 = vmatpush1.bf16.msra.mxu0 %v159
    %165 = vmatprep.subr.bf16.mxu0 0
    %166 = vmatpush1.bf16.msra.mxu0 %v160
    %167 = vmatprep.subr.bf16.mxu0 0
    %168 = vmatpush1.bf16.msra.mxu0 0
    %169 = vmatprep.subr.bf16.mxu0 0
    %170 = vmatpush1.bf16.msra.mxu0 0
    %171 = vmatprep.subr.bf16.mxu0 0
    %172 = vmatpush1.bf16.msra.mxu0 0
    %173 = vmatprep.subr.bf16.mxu0 0
    %174 = vmatpush1.bf16.msra.mxu0 0
    %175 = vmatprep.subr.bf16.mxu0 0
    %176 = vmatpush1.bf16.msra.mxu0 0
    %177 = vmatprep.subr.bf16.mxu0 0
    %178 = vmatpush1.bf16.msra.mxu0 0
    %179 = vmatprep.subr.bf16.mxu0 0
    %180 = vmatpush1.bf16.msra.mxu0 0
    %181 = vmatprep.subr.bf16.mxu0 0
    %182 = vmatpush1.bf16.msra.mxu0 0
    %183 = vmatprep.subr.bf16.mxu0 0
    %184 = vmatpush1.bf16.msra.mxu0 0
    %185 = vmatprep.subr.bf16.mxu0 0
    %186 = vmatpush1.bf16.msra.mxu0 0
    %187 = vmatprep.subr.bf16.mxu0 0
    %188 = vmatpush1.bf16.msra.mxu0 0
    %189 = vmatprep.subr.bf16.mxu0 0
    %190 = vmatpush1.bf16.msra.mxu0 0
    %191 = vmatprep.subr.bf16.mxu0 0
    %192 = vmatpush1.bf16.msra.mxu0 0
    %193 = vmatprep.subr.bf16.mxu0 0
    %194 = vmatpush1.bf16.msra.mxu0 0
    %195 = vmatprep.mubr.bf16.mxu0 0
    %196 = vmatmul.mubr.bf16.gmra.mrb[0].mxu0 %v103
    %v197 = vpop.f32.mrb[0].mxu0
    %v198 = vadd.f32 %v150, %v197
    %v199 = vpop.f32.mrb[0].mxu0
    %v200 = vpop.f32.mrb[0].mxu0
    %v201 = vadd.f32 %v150, %v200
    %v202 = vpop.f32.mrb[0].mxu0
    %203 = vdwg.mxu0
    %v204 = vpack.c.bf16 %v201, %v198
    %v206 = vunpack.c.l.b16 %v146
    %v207 = vunpack.c.h.b16 %v146
    %v208 = vpack.c.b16 %v206, %v206
    %v209 = vpack.c.b16 %v207, %v207
    %v211 = vunpack.c.l.b16 %v204
    %v212 = vunpack.c.h.b16 %v204
    %v213 = vpack.c.b16 %v211, %v211
    %v214 = vpack.c.b16 %v212, %v212
    %vm215 = vcmask 64512
    %v217 = vsel %vm215, %v62, 0
    %v220 = vsel %vm215, %v208, 0
    %222 = vmatprep.subr.bf16.mxu0 0
    %223 = vmatpush1.bf16.xpose.msra.mxu0 %v220
    %224 = vmatprep.subr.bf16.mxu0 0
    %225 = vmatpush1.bf16.xpose.msra.mxu0 0
    %226 = vmatprep.subr.bf16.mxu0 0
    %227 = vmatpush1.bf16.xpose.msra.mxu0 0
    %228 = vmatprep.subr.bf16.mxu0 0
    %229 = vmatpush1.bf16.xpose.msra.mxu0 0
    %230 = vmatprep.subr.bf16.mxu0 0
    %231 = vmatpush1.bf16.xpose.msra.mxu0 0
    %232 = vmatprep.subr.bf16.mxu0 0
    %233 = vmatpush1.bf16.xpose.msra.mxu0 0
    %234 = vmatprep.subr.bf16.mxu0 0
    %235 = vmatpush1.bf16.xpose.msra.mxu0 0
    %236 = vmatprep.subr.bf16.mxu0 0
    %237 = vmatpush1.bf16.xpose.msra.mxu0 0
    %238 = vmatprep.subr.bf16.mxu0 0
    %239 = vmatpush1.bf16.xpose.msra.mxu0 0
    %240 = vmatprep.subr.bf16.mxu0 0
    %241 = vmatpush1.bf16.xpose.msra.mxu0 0
    %242 = vmatprep.subr.bf16.mxu0 0
    %243 = vmatpush1.bf16.xpose.msra.mxu0 0
    %244 = vmatprep.subr.bf16.mxu0 0
    %245 = vmatpush1.bf16.xpose.msra.mxu0 0
    %246 = vmatprep.subr.bf16.mxu0 0
    %247 = vmatpush1.bf16.xpose.msra.mxu0 0
    %248 = vmatprep.subr.bf16.mxu0 0
    %249 = vmatpush1.bf16.xpose.msra.mxu0 0
    %250 = vmatprep.subr.bf16.mxu0 0
    %251 = vmatpush1.bf16.xpose.msra.mxu0 0
    %252 = vmatprep.subr.bf16.mxu0 0
    %253 = vmatpush1.bf16.xpose.msra.mxu0 0
    %254 = vmatprep.mubr.bf16.mxu0 0
    %255 = vmatmul.mubr.bf16.gmra.mrb[0].mxu0 %v217
    %v256 = vpop.f32.mrb[0].mxu0
    %v257 = vadd.f32 0.0, %v256
    %v258 = vpop.f32.mrb[0].mxu0
    %v259 = vpop.f32.mrb[0].mxu0
    %v260 = vpop.f32.mrb[0].mxu0
    %261 = vdwg.mxu0
    %v263 = vsel %vm215, %v209, 0
    %265 = vmatprep.subr.bf16.mxu0 0
    %266 = vmatpush1.bf16.xpose.msra.mxu0 %v263
    %267 = vmatprep.subr.bf16.mxu0 0
    %268 = vmatpush1.bf16.xpose.msra.mxu0 0
    %269 = vmatprep.subr.bf16.mxu0 0
    %270 = vmatpush1.bf16.xpose.msra.mxu0 0
    %271 = vmatprep.subr.bf16.mxu0 0
    %272 = vmatpush1.bf16.xpose.msra.mxu0 0
    %273 = vmatprep.subr.bf16.mxu0 0
    %274 = vmatpush1.bf16.xpose.msra.mxu0 0
    %275 = vmatprep.subr.bf16.mxu0 0
    %276 = vmatpush1.bf16.xpose.msra.mxu0 0
    %277 = vmatprep.subr.bf16.mxu0 0
    %278 = vmatpush1.bf16.xpose.msra.mxu0 0
    %279 = vmatprep.subr.bf16.mxu0 0
    %280 = vmatpush1.bf16.xpose.msra.mxu0 0
    %281 = vmatprep.subr.bf16.mxu0 0
    %282 = vmatpush1.bf16.xpose.msra.mxu0 0
    %283 = vmatprep.subr.bf16.mxu0 0
    %284 = vmatpush1.bf16.xpose.msra.mxu0 0
    %285 = vmatprep.subr.bf16.mxu0 0
    %286 = vmatpush1.bf16.xpose.msra.mxu0 0
    %287 = vmatprep.subr.bf16.mxu0 0
    %288 = vmatpush1.bf16.xpose.msra.mxu0 0
    %289 = vmatprep.subr.bf16.mxu0 0
    %290 = vmatpush1.bf16.xpose.msra.mxu0 0
    %291 = vmatprep.subr.bf16.mxu0 0
    %292 = vmatpush1.bf16.xpose.msra.mxu0 0
    %293 = vmatprep.subr.bf16.mxu0 0
    %294 = vmatpush1.bf16.xpose.msra.mxu0 0
    %295 = vmatprep.subr.bf16.mxu0 0
    %296 = vmatpush1.bf16.xpose.msra.mxu0 0
    %297 = vmatprep.mubr.bf16.mxu0 0
    %298 = vmatmul.mubr.bf16.gmra.mrb[0].mxu0 %v217
    %v299 = vpop.f32.mrb[0].mxu0
    %v300 = vadd.f32 0.0, %v299
    %v301 = vpop.f32.mrb[0].mxu0
    %v302 = vpop.f32.mrb[0].mxu0
    %v303 = vpop.f32.mrb[0].mxu0
    %304 = vdwg.mxu0
    %v305 = vmul.f32 %v257, 0.17677669
    %v306 = vmul.f32 %v300, 0.17677669
    %vm307 = vcmask 60416
    %v308 = vsel %vm307, %v305, -inf
    %309 = vmax.xlane.f32.xlu0 %v308
    %v310 = vpop.xlane.xlu0 %309
    %v311 = vsel %vm307, %v306, -inf
    %312 = vmax.xlane.f32.xlu0 %v311
    %v313 = vpop.xlane.xlu0 %312
    %v314 = vsub.f32 %v305, %v310
    %v315 = vsub.f32 %v306, %v313
    %v316 = vmul.f32 %v314, 1.442695
    %v317 = vpow.pop %v316
    %v318 = vmul.f32 %v315, 1.442695
    %v319 = vpow.pop %v318
    %v320 = vsel %vm307, %v317, 0.0
    %321 = vadd.xlane.f32.xlu0 %v320
    %v322 = vpop.xlane.xlu0 %321
    %v323 = vsel %vm307, %v319, 0.0
    %324 = vadd.xlane.f32.xlu0 %v323
    %v325 = vpop.xlane.xlu0 %324
    %v326 = vrcp.pop %v322
    %v327 = vrcp.pop %v325
    %v328 = vmul.f32 %v317, %v326
    %v329 = vmul.f32 %v319, %v327
    %v330 = vpack.c.bf16 %v328, %v328
    %v331 = vpack.c.bf16 %v329, %v329
    %v333 = vsel %vm215, %v330, 0
    %vm335 = vcmask 1043456
    %v337 = vsel %vm335, %v213, 0
    %339 = vmatprep.subr.bf16.mxu0 0
    %340 = vmatpush1.bf16.msra.mxu0 %v337
    %341 = vmatprep.subr.bf16.mxu0 0
    %342 = vmatpush1.bf16.msra.mxu0 0
    %343 = vmatprep.subr.bf16.mxu0 0
    %344 = vmatpush1.bf16.msra.mxu0 0
    %345 = vmatprep.subr.bf16.mxu0 0
    %346 = vmatpush1.bf16.msra.mxu0 0
    %347 = vmatprep.subr.bf16.mxu0 0
    %348 = vmatpush1.bf16.msra.mxu0 0
    %349 = vmatprep.subr.bf16.mxu0 0
    %350 = vmatpush1.bf16.msra.mxu0 0
    %351 = vmatprep.subr.bf16.mxu0 0
    %352 = vmatpush1.bf16.msra.mxu0 0
    %353 = vmatprep.subr.bf16.mxu0 0
    %354 = vmatpush1.bf16.msra.mxu0 0
    %355 = vmatprep.subr.bf16.mxu0 0
    %356 = vmatpush1.bf16.msra.mxu0 0
    %357 = vmatprep.subr.bf16.mxu0 0
    %358 = vmatpush1.bf16.msra.mxu0 0
    %359 = vmatprep.subr.bf16.mxu0 0
    %360 = vmatpush1.bf16.msra.mxu0 0
    %361 = vmatprep.subr.bf16.mxu0 0
    %362 = vmatpush1.bf16.msra.mxu0 0
    %363 = vmatprep.subr.bf16.mxu0 0
    %364 = vmatpush1.bf16.msra.mxu0 0
    %365 = vmatprep.subr.bf16.mxu0 0
    %366 = vmatpush1.bf16.msra.mxu0 0
    %367 = vmatprep.subr.bf16.mxu0 0
    %368 = vmatpush1.bf16.msra.mxu0 0
    %369 = vmatprep.subr.bf16.mxu0 0
    %370 = vmatpush1.bf16.msra.mxu0 0
    %371 = vmatprep.mubr.bf16.mxu0 0
    %372 = vmatmul.mubr.bf16.gmra.mrb[0].mxu0 %v333
    %v373 = vpop.f32.mrb[0].mxu0
    %v374 = vadd.f32 0.0, %v373
    %v375 = vpop.f32.mrb[0].mxu0
    %v376 = vpop.f32.mrb[0].mxu0
    %v377 = vpop.f32.mrb[0].mxu0
    %378 = vdwg.mxu0
    %v380 = vsel %vm215, %v331, 0
    %v383 = vsel %vm335, %v214, 0
    %385 = vmatprep.subr.bf16.mxu0 0
    %386 = vmatpush1.bf16.msra.mxu0 %v383
    %387 = vmatprep.subr.bf16.mxu0 0
    %388 = vmatpush1.bf16.msra.mxu0 0
    %389 = vmatprep.subr.bf16.mxu0 0
    %390 = vmatpush1.bf16.msra.mxu0 0
    %391 = vmatprep.subr.bf16.mxu0 0
    %392 = vmatpush1.bf16.msra.mxu0 0
    %393 = vmatprep.subr.bf16.mxu0 0
    %394 = vmatpush1.bf16.msra.mxu0 0
    %395 = vmatprep.subr.bf16.mxu0 0
    %396 = vmatpush1.bf16.msra.mxu0 0
    %397 = vmatprep.subr.bf16.mxu0 0
    %398 = vmatpush1.bf16.msra.mxu0 0
    %399 = vmatprep.subr.bf16.mxu0 0
    %400 = vmatpush1.bf16.msra.mxu0 0
    %401 = vmatprep.subr.bf16.mxu0 0
    %402 = vmatpush1.bf16.msra.mxu0 0
    %403 = vmatprep.subr.bf16.mxu0 0
    %404 = vmatpush1.bf16.msra.mxu0 0
    %405 = vmatprep.subr.bf16.mxu0 0
    %406 = vmatpush1.bf16.msra.mxu0 0
    %407 = vmatprep.subr.bf16.mxu0 0
    %408 = vmatpush1.bf16.msra.mxu0 0
    %409 = vmatprep.subr.bf16.mxu0 0
    %410 = vmatpush1.bf16.msra.mxu0 0
    %411 = vmatprep.subr.bf16.mxu0 0
    %412 = vmatpush1.bf16.msra.mxu0 0
    %413 = vmatprep.subr.bf16.mxu0 0
    %414 = vmatpush1.bf16.msra.mxu0 0
    %415 = vmatprep.subr.bf16.mxu0 0
    %416 = vmatpush1.bf16.msra.mxu0 0
    %417 = vmatprep.mubr.bf16.mxu0 0
    %418 = vmatmul.mubr.bf16.gmra.mrb[0].mxu0 %v380
    %v419 = vpop.f32.mrb[0].mxu0
    %v420 = vadd.f32 0.0, %v419
    %v421 = vpop.f32.mrb[0].mxu0
    %v422 = vpop.f32.mrb[0].mxu0
    %v423 = vpop.f32.mrb[0].mxu0
    %424 = vdwg.mxu0
    %v427 = vcombine.low %v374, %v420
    %v429 = vpack.c.bf16 %v427, %v427
    %v432 = vunpack.c.l.s4 1983009808
    %v433 = vunpack.c.0.s8 %v432
    %v434 = vlaneseq
    %v435 = vshrl.u32 %v434, 7
    %v436 = vsub.s32 %v433, %v435
    %v437 = vrot.slane %v62, %v436
    %438 = vrot.lane.b32.xlu0 %v437, 120
    %v439 = vpop.permute.xlu0 %438
    %440 = vrot.lane.b32.xlu0 %v208, 120
    %v441 = vpop.permute.xlu0 %440
    %v443 = vsel %vm215, %v439, 0
    %v446 = vsel %vm215, %v441, 0
    %448 = vmatprep.subr.bf16.mxu0 0
    %449 = vmatpush1.bf16.xpose.msra.mxu0 %v446
    %450 = vmatprep.subr.bf16.mxu0 0
    %451 = vmatpush1.bf16.xpose.msra.mxu0 0
    %452 = vmatprep.subr.bf16.mxu0 0
    %453 = vmatpush1.bf16.xpose.msra.mxu0 0
    %454 = vmatprep.subr.bf16.mxu0 0
    %455 = vmatpush1.bf16.xpose.msra.mxu0 0
    %456 = vmatprep.subr.bf16.mxu0 0
    %457 = vmatpush1.bf16.xpose.msra.mxu0 0
    %458 = vmatprep.subr.bf16.mxu0 0
    %459 = vmatpush1.bf16.xpose.msra.mxu0 0
    %460 = vmatprep.subr.bf16.mxu0 0
    %461 = vmatpush1.bf16.xpose.msra.mxu0 0
    %462 = vmatprep.subr.bf16.mxu0 0
    %463 = vmatpush1.bf16.xpose.msra.mxu0 0
    %464 = vmatprep.subr.bf16.mxu0 0
    %465 = vmatpush1.bf16.xpose.msra.mxu0 0
    %466 = vmatprep.subr.bf16.mxu0 0
    %467 = vmatpush1.bf16.xpose.msra.mxu0 0
    %468 = vmatprep.subr.bf16.mxu0 0
    %469 = vmatpush1.bf16.xpose.msra.mxu0 0
    %470 = vmatprep.subr.bf16.mxu0 0
    %471 = vmatpush1.bf16.xpose.msra.mxu0 0
    %472 = vmatprep.subr.bf16.mxu0 0
    %473 = vmatpush1.bf16.xpose.msra.mxu0 0
    %474 = vmatprep.subr.bf16.mxu0 0
    %475 = vmatpush1.bf16.xpose.msra.mxu0 0
    %476 = vmatprep.subr.bf16.mxu0 0
    %477 = vmatpush1.bf16.xpose.msra.mxu0 0
    %478 = vmatprep.subr.bf16.mxu0 0
    %479 = vmatpush1.bf16.xpose.msra.mxu0 0
    %480 = vmatprep.mubr.bf16.mxu0 0
    %481 = vmatmul.mubr.bf16.gmra.mrb[0].mxu0 %v443
    %v482 = vpop.f32.mrb[0].mxu0
    %v483 = vadd.f32 0.0, %v482
    %v484 = vpop.f32.mrb[0].mxu0
    %v485 = vpop.f32.mrb[0].mxu0
    %v486 = vpop.f32.mrb[0].mxu0
    %487 = vdwg.mxu0
    %488 = vrot.lane.b32.xlu0 %v209, 120
    %v489 = vpop.permute.xlu0 %488
    %v491 = vsel %vm215, %v489, 0
    %493 = vmatprep.subr.bf16.mxu0 0
    %494 = vmatpush1.bf16.xpose.msra.mxu0 %v491
    %495 = vmatprep.subr.bf16.mxu0 0
    %496 = vmatpush1.bf16.xpose.msra.mxu0 0
    %497 = vmatprep.subr.bf16.mxu0 0
    %498 = vmatpush1.bf16.xpose.msra.mxu0 0
    %499 = vmatprep.subr.bf16.mxu0 0
    %500 = vmatpush1.bf16.xpose.msra.mxu0 0
    %501 = vmatprep.subr.bf16.mxu0 0
    %502 = vmatpush1.bf16.xpose.msra.mxu0 0
    %503 = vmatprep.subr.bf16.mxu0 0
    %504 = vmatpush1.bf16.xpose.msra.mxu0 0
    %505 = vmatprep.subr.bf16.mxu0 0
    %506 = vmatpush1.bf16.xpose.msra.mxu0 0
    %507 = vmatprep.subr.bf16.mxu0 0
    %508 = vmatpush1.bf16.xpose.msra.mxu0 0
    %509 = vmatprep.subr.bf16.mxu0 0
    %510 = vmatpush1.bf16.xpose.msra.mxu0 0
    %511 = vmatprep.subr.bf16.mxu0 0
    %512 = vmatpush1.bf16.xpose.msra.mxu0 0
    %513 = vmatprep.subr.bf16.mxu0 0
    %514 = vmatpush1.bf16.xpose.msra.mxu0 0
    %515 = vmatprep.subr.bf16.mxu0 0
    %516 = vmatpush1.bf16.xpose.msra.mxu0 0
    %517 = vmatprep.subr.bf16.mxu0 0
    %518 = vmatpush1.bf16.xpose.msra.mxu0 0
    %519 = vmatprep.subr.bf16.mxu0 0
    %520 = vmatpush1.bf16.xpose.msra.mxu0 0
    %521 = vmatprep.subr.bf16.mxu0 0
    %522 = vmatpush1.bf16.xpose.msra.mxu0 0
    %523 = vmatprep.subr.bf16.mxu0 0
    %524 = vmatpush1.bf16.xpose.msra.mxu0 0
    %525 = vmatprep.mubr.bf16.mxu0 0
    %526 = vmatmul.mubr.bf16.gmra.mrb[0].mxu0 %v443
    %v527 = vpop.f32.mrb[0].mxu0
    %v528 = vadd.f32 0.0, %v527
    %v529 = vpop.f32.mrb[0].mxu0
    %v530 = vpop.f32.mrb[0].mxu0
    %v531 = vpop.f32.mrb[0].mxu0
    %532 = vdwg.mxu0
    %v533 = vmul.f32 %v483, 0.17677669
    %v534 = vmul.f32 %v528, 0.17677669
    %v535 = vsel %vm307, %v533, -inf
    %536 = vmax.xlane.f32.xlu0 %v535
    %v537 = vpop.xlane.xlu0 %536
    %v538 = vsel %vm307, %v534, -inf
    %539 = vmax.xlane.f32.xlu0 %v538
    %v540 = vpop.xlane.xlu0 %539
    %v541 = vsub.f32 %v533, %v537
    %v542 = vsub.f32 %v534, %v540
    %v543 = vmul.f32 %v541, 1.442695
    %v544 = vpow.pop %v543
    %v545 = vmul.f32 %v542, 1.442695
    %v546 = vpow.pop %v545
    %v547 = vsel %vm307, %v544, 0.0
    %548 = vadd.xlane.f32.xlu0 %v547
    %v549 = vpop.xlane.xlu0 %548
    %v550 = vsel %vm307, %v546, 0.0
    %551 = vadd.xlane.f32.xlu0 %v550
    %v552 = vpop.xlane.xlu0 %551
    %v553 = vrcp.pop %v549
    %v554 = vrcp.pop %v552
    %v555 = vmul.f32 %v544, %v553
    %v556 = vmul.f32 %v546, %v554
    %v557 = vpack.c.bf16 %v555, %v555
    %v558 = vpack.c.bf16 %v556, %v556
    %559 = vrot.lane.b32.xlu0 %v213, 120
    %v560 = vpop.permute.xlu0 %559
    %v562 = vsel %vm215, %v557, 0
    %v565 = vsel %vm335, %v560, 0
    %567 = vmatprep.subr.bf16.mxu0 0
    %568 = vmatpush1.bf16.msra.mxu0 %v565
    %569 = vmatprep.subr.bf16.mxu0 0
    %570 = vmatpush1.bf16.msra.mxu0 0
    %571 = vmatprep.subr.bf16.mxu0 0
    %572 = vmatpush1.bf16.msra.mxu0 0
    %573 = vmatprep.subr.bf16.mxu0 0
    %574 = vmatpush1.bf16.msra.mxu0 0
    %575 = vmatprep.subr.bf16.mxu0 0
    %576 = vmatpush1.bf16.msra.mxu0 0
    %577 = vmatprep.subr.bf16.mxu0 0
    %578 = vmatpush1.bf16.msra.mxu0 0
    %579 = vmatprep.subr.bf16.mxu0 0
    %580 = vmatpush1.bf16.msra.mxu0 0
    %581 = vmatprep.subr.bf16.mxu0 0
    %582 = vmatpush1.bf16.msra.mxu0 0
    %583 = vmatprep.subr.bf16.mxu0 0
    %584 = vmatpush1.bf16.msra.mxu0 0
    %585 = vmatprep.subr.bf16.mxu0 0
    %586 = vmatpush1.bf16.msra.mxu0 0
    %587 = vmatprep.subr.bf16.mxu0 0
    %588 = vmatpush1.bf16.msra.mxu0 0
    %589 = vmatprep.subr.bf16.mxu0 0
    %590 = vmatpush1.bf16.msra.mxu0 0
    %591 = vmatprep.subr.bf16.mxu0 0
    %592 = vmatpush1.bf16.msra.mxu0 0
    %593 = vmatprep.subr.bf16.mxu0 0
    %594 = vmatpush1.bf16.msra.mxu0 0
    %595 = vmatprep.subr.bf16.mxu0 0
    %596 = vmatpush1.bf16.msra.mxu0 0
    %597 = vmatprep.subr.bf16.mxu0 0
    %598 = vmatpush1.bf16.msra.mxu0 0
    %599 = vmatprep.mubr.bf16.mxu0 0
    %600 = vmatmul.mubr.bf16.gmra.mrb[0].mxu0 %v562
    %v601 = vpop.f32.mrb[0].mxu0
    %v602 = vadd.f32 0.0, %v601
    %v603 = vpop.f32.mrb[0].mxu0
    %v604 = vpop.f32.mrb[0].mxu0
    %v605 = vpop.f32.mrb[0].mxu0
    %606 = vdwg.mxu0
    %607 = vrot.lane.b32.xlu0 %v214, 120
    %v608 = vpop.permute.xlu0 %607
    %v610 = vsel %vm215, %v558, 0
    %v613 = vsel %vm335, %v608, 0
    %615 = vmatprep.subr.bf16.mxu0 0
    %616 = vmatpush1.bf16.msra.mxu0 %v613
    %617 = vmatprep.subr.bf16.mxu0 0
    %618 = vmatpush1.bf16.msra.mxu0 0
    %619 = vmatprep.subr.bf16.mxu0 0
    %620 = vmatpush1.bf16.msra.mxu0 0
    %621 = vmatprep.subr.bf16.mxu0 0
    %622 = vmatpush1.bf16.msra.mxu0 0
    %623 = vmatprep.subr.bf16.mxu0 0
    %624 = vmatpush1.bf16.msra.mxu0 0
    %625 = vmatprep.subr.bf16.mxu0 0
    %626 = vmatpush1.bf16.msra.mxu0 0
    %627 = vmatprep.subr.bf16.mxu0 0
    %628 = vmatpush1.bf16.msra.mxu0 0
    %629 = vmatprep.subr.bf16.mxu0 0
    %630 = vmatpush1.bf16.msra.mxu0 0
    %631 = vmatprep.subr.bf16.mxu0 0
    %632 = vmatpush1.bf16.msra.mxu0 0
    %633 = vmatprep.subr.bf16.mxu0 0
    %634 = vmatpush1.bf16.msra.mxu0 0
    %635 = vmatprep.subr.bf16.mxu0 0
    %636 = vmatpush1.bf16.msra.mxu0 0
    %637 = vmatprep.subr.bf16.mxu0 0
    %638 = vmatpush1.bf16.msra.mxu0 0
    %639 = vmatprep.subr.bf16.mxu0 0
    %640 = vmatpush1.bf16.msra.mxu0 0
    %641 = vmatprep.subr.bf16.mxu0 0
    %642 = vmatpush1.bf16.msra.mxu0 0
    %643 = vmatprep.subr.bf16.mxu0 0
    %644 = vmatpush1.bf16.msra.mxu0 0
    %645 = vmatprep.subr.bf16.mxu0 0
    %646 = vmatpush1.bf16.msra.mxu0 0
    %647 = vmatprep.mubr.bf16.mxu0 0
    %648 = vmatmul.mubr.bf16.gmra.mrb[0].mxu0 %v610
    %v649 = vpop.f32.mrb[0].mxu0
    %v650 = vadd.f32 0.0, %v649
    %v651 = vpop.f32.mrb[0].mxu0
    %v652 = vpop.f32.mrb[0].mxu0
    %v653 = vpop.f32.mrb[0].mxu0
    %654 = vdwg.mxu0
    %v657 = vcombine.low %v602, %v650
    %v659 = vpack.c.bf16 %v657, %v657
    %v661 = vsel %vm215, %v659, 0
    %v664 = vsel %vm335, %v75, 0
    %666 = vmatprep.subr.bf16.mxu0 0
    %667 = vmatpush1.bf16.msra.mxu0 %v664
    %668 = vmatprep.subr.bf16.mxu0 0
    %669 = vmatpush1.bf16.msra.mxu0 0
    %670 = vmatprep.subr.bf16.mxu0 0
    %671 = vmatpush1.bf16.msra.mxu0 0
    %672 = vmatprep.subr.bf16.mxu0 0
    %673 = vmatpush1.bf16.msra.mxu0 0
    %674 = vmatprep.subr.bf16.mxu0 0
    %675 = vmatpush1.bf16.msra.mxu0 0
    %676 = vmatprep.subr.bf16.mxu0 0
    %677 = vmatpush1.bf16.msra.mxu0 0
    %678 = vmatprep.subr.bf16.mxu0 0
    %679 = vmatpush1.bf16.msra.mxu0 0
    %680 = vmatprep.subr.bf16.mxu0 0
    %681 = vmatpush1.bf16.msra.mxu0 0
    %682 = vmatprep.subr.bf16.mxu0 0
    %683 = vmatpush1.bf16.msra.mxu0 0
    %684 = vmatprep.subr.bf16.mxu0 0
    %685 = vmatpush1.bf16.msra.mxu0 0
    %686 = vmatprep.subr.bf16.mxu0 0
    %687 = vmatpush1.bf16.msra.mxu0 0
    %688 = vmatprep.subr.bf16.mxu0 0
    %689 = vmatpush1.bf16.msra.mxu0 0
    %690 = vmatprep.subr.bf16.mxu0 0
    %691 = vmatpush1.bf16.msra.mxu0 0
    %692 = vmatprep.subr.bf16.mxu0 0
    %693 = vmatpush1.bf16.msra.mxu0 0
    %694 = vmatprep.subr.bf16.mxu0 0
    %695 = vmatpush1.bf16.msra.mxu0 0
    %696 = vmatprep.subr.bf16.mxu0 0
    %697 = vmatpush1.bf16.msra.mxu0 0
    %698 = vmatprep.mubr.bf16.mxu0 0
    %699 = vmatmul.mubr.bf16.gmra.mrb[0].mxu0 %v661
    %v700 = vpop.f32.mrb[0].mxu0
    %v701 = vadd.f32 0.0, %v700
    %v702 = vpop.f32.mrb[0].mxu0
    %v703 = vpop.f32.mrb[0].mxu0
    %v704 = vpop.f32.mrb[0].mxu0
    %705 = vdwg.mxu0
    %v707 = vsel %vm215, %v429, 0
    %v710 = vsel %vm335, %v74, 0
    %712 = vmatprep.subr.bf16.mxu0 0
    %713 = vmatpush1.bf16.msra.mxu0 %v710
    %714 = vmatprep.subr.bf16.mxu0 0
    %715 = vmatpush1.bf16.msra.mxu0 0
    %716 = vmatprep.subr.bf16.mxu0 0
    %717 = vmatpush1.bf16.msra.mxu0 0
    %718 = vmatprep.subr.bf16.mxu0 0
    %719 = vmatpush1.bf16.msra.mxu0 0
    %720 = vmatprep.subr.bf16.mxu0 0
    %721 = vmatpush1.bf16.msra.mxu0 0
    %722 = vmatprep.subr.bf16.mxu0 0
    %723 = vmatpush1.bf16.msra.mxu0 0
    %724 = vmatprep.subr.bf16.mxu0 0
    %725 = vmatpush1.bf16.msra.mxu0 0
    %726 = vmatprep.subr.bf16.mxu0 0
    %727 = vmatpush1.bf16.msra.mxu0 0
    %728 = vmatprep.subr.bf16.mxu0 0
    %729 = vmatpush1.bf16.msra.mxu0 0
    %730 = vmatprep.subr.bf16.mxu0 0
    %731 = vmatpush1.bf16.msra.mxu0 0
    %732 = vmatprep.subr.bf16.mxu0 0
    %733 = vmatpush1.bf16.msra.mxu0 0
    %734 = vmatprep.subr.bf16.mxu0 0
    %735 = vmatpush1.bf16.msra.mxu0 0
    %736 = vmatprep.subr.bf16.mxu0 0
    %737 = vmatpush1.bf16.msra.mxu0 0
    %738 = vmatprep.subr.bf16.mxu0 0
    %739 = vmatpush1.bf16.msra.mxu0 0
    %740 = vmatprep.subr.bf16.mxu0 0
    %741 = vmatpush1.bf16.msra.mxu0 0
    %742 = vmatprep.subr.bf16.mxu0 0
    %743 = vmatpush1.bf16.msra.mxu0 0
    %744 = vmatprep.mubr.bf16.mxu0 0
    %745 = vmatmul.mubr.bf16.gmra.mrb[0].mxu0 %v707
    %v746 = vpop.f32.mrb[0].mxu0
    %v747 = vadd.f32 %v701, %v746
    %v748 = vpop.f32.mrb[0].mxu0
    %v749 = vpop.f32.mrb[0].mxu0
    %v750 = vpop.f32.mrb[0].mxu0
    %751 = vdwg.mxu0
    %752 = vrot.lane.b32.xlu0 %v437, 112
    %v753 = vpop.permute.xlu0 %752
    %754 = vrot.lane.b32.xlu0 %v208, 112
    %v755 = vpop.permute.xlu0 %754
    %v757 = vsel %vm215, %v753, 0
    %v760 = vsel %vm215, %v755, 0
    %762 = vmatprep.subr.bf16.mxu0 0
    %763 = vmatpush1.bf16.xpose.msra.mxu0 %v760
    %764 = vmatprep.subr.bf16.mxu0 0
    %765 = vmatpush1.bf16.xpose.msra.mxu0 0
    %766 = vmatprep.subr.bf16.mxu0 0
    %767 = vmatpush1.bf16.xpose.msra.mxu0 0
    %768 = vmatprep.subr.bf16.mxu0 0
    %769 = vmatpush1.bf16.xpose.msra.mxu0 0
    %770 = vmatprep.subr.bf16.mxu0 0
    %771 = vmatpush1.bf16.xpose.msra.mxu0 0
    %772 = vmatprep.subr.bf16.mxu0 0
    %773 = vmatpush1.bf16.xpose.msra.mxu0 0
    %774 = vmatprep.subr.bf16.mxu0 0
    %775 = vmatpush1.bf16.xpose.msra.mxu0 0
    %776 = vmatprep.subr.bf16.mxu0 0
    %777 = vmatpush1.bf16.xpose.msra.mxu0 0
    %778 = vmatprep.subr.bf16.mxu0 0
    %779 = vmatpush1.bf16.xpose.msra.mxu0 0
    %780 = vmatprep.subr.bf16.mxu0 0
    %781 = vmatpush1.bf16.xpose.msra.mxu0 0
    %782 = vmatprep.subr.bf16.mxu0 0
    %783 = vmatpush1.bf16.xpose.msra.mxu0 0
    %784 = vmatprep.subr.bf16.mxu0 0
    %785 = vmatpush1.bf16.xpose.msra.mxu0 0
    %786 = vmatprep.subr.bf16.mxu0 0
    %787 = vmatpush1.bf16.xpose.msra.mxu0 0
    %788 = vmatprep.subr.bf16.mxu0 0
    %789 = vmatpush1.bf16.xpose.msra.mxu0 0
    %790 = vmatprep.subr.bf16.mxu0 0
    %791 = vmatpush1.bf16.xpose.msra.mxu0 0
    %792 = vmatprep.subr.bf16.mxu0 0
    %793 = vmatpush1.bf16.xpose.msra.mxu0 0
    %794 = vmatprep.mubr.bf16.mxu0 0
    %795 = vmatmul.mubr.bf16.gmra.mrb[0].mxu0 %v757
    %v796 = vpop.f32.mrb[0].mxu0
    %v797 = vadd.f32 0.0, %v796
    %v798 = vpop.f32.mrb[0].mxu0
    %v799 = vpop.f32.mrb[0].mxu0
    %v800 = vpop.f32.mrb[0].mxu0
    %801 = vdwg.mxu0
    %802 = vrot.lane.b32.xlu0 %v209, 112
    %v803 = vpop.permute.xlu0 %802
    %v805 = vsel %vm215, %v803, 0
    %807 = vmatprep.subr.bf16.mxu0 0
    %808 = vmatpush1.bf16.xpose.msra.mxu0 %v805
    %809 = vmatprep.subr.bf16.mxu0 0
    %810 = vmatpush1.bf16.xpose.msra.mxu0 0
    %811 = vmatprep.subr.bf16.mxu0 0
    %812 = vmatpush1.bf16.xpose.msra.mxu0 0
    %813 = vmatprep.subr.bf16.mxu0 0
    %814 = vmatpush1.bf16.xpose.msra.mxu0 0
    %815 = vmatprep.subr.bf16.mxu0 0
    %816 = vmatpush1.bf16.xpose.msra.mxu0 0
    %817 = vmatprep.subr.bf16.mxu0 0
    %818 = vmatpush1.bf16.xpose.msra.mxu0 0
    %819 = vmatprep.subr.bf16.mxu0 0
    %820 = vmatpush1.bf16.xpose.msra.mxu0 0
    %821 = vmatprep.subr.bf16.mxu0 0
    %822 = vmatpush1.bf16.xpose.msra.mxu0 0
    %823 = vmatprep.subr.bf16.mxu0 0
    %824 = vmatpush1.bf16.xpose.msra.mxu0 0
    %825 = vmatprep.subr.bf16.mxu0 0
    %826 = vmatpush1.bf16.xpose.msra.mxu0 0
    %827 = vmatprep.subr.bf16.mxu0 0
    %828 = vmatpush1.bf16.xpose.msra.mxu0 0
    %829 = vmatprep.subr.bf16.mxu0 0
    %830 = vmatpush1.bf16.xpose.msra.mxu0 0
    %831 = vmatprep.subr.bf16.mxu0 0
    %832 = vmatpush1.bf16.xpose.msra.mxu0 0
    %833 = vmatprep.subr.bf16.mxu0 0
    %834 = vmatpush1.bf16.xpose.msra.mxu0 0
    %835 = vmatprep.subr.bf16.mxu0 0
    %836 = vmatpush1.bf16.xpose.msra.mxu0 0
    %837 = vmatprep.subr.bf16.mxu0 0
    %838 = vmatpush1.bf16.xpose.msra.mxu0 0
    %839 = vmatprep.mubr.bf16.mxu0 0
    %840 = vmatmul.mubr.bf16.gmra.mrb[0].mxu0 %v757
    %v841 = vpop.f32.mrb[0].mxu0
    %v842 = vadd.f32 0.0, %v841
    %v843 = vpop.f32.mrb[0].mxu0
    %v844 = vpop.f32.mrb[0].mxu0
    %v845 = vpop.f32.mrb[0].mxu0
    %846 = vdwg.mxu0
    %v847 = vmul.f32 %v797, 0.17677669
    %v848 = vmul.f32 %v842, 0.17677669
    %v849 = vsel %vm307, %v847, -inf
    %850 = vmax.xlane.f32.xlu0 %v849
    %v851 = vpop.xlane.xlu0 %850
    %v852 = vsel %vm307, %v848, -inf
    %853 = vmax.xlane.f32.xlu0 %v852
    %v854 = vpop.xlane.xlu0 %853
    %v855 = vsub.f32 %v847, %v851
    %v856 = vsub.f32 %v848, %v854
    %v857 = vmul.f32 %v855, 1.442695
    %v858 = vpow.pop %v857
    %v859 = vmul.f32 %v856, 1.442695
    %v860 = vpow.pop %v859
    %v861 = vsel %vm307, %v858, 0.0
    %862 = vadd.xlane.f32.xlu0 %v861
    %v863 = vpop.xlane.xlu0 %862
    %v864 = vsel %vm307, %v860, 0.0
    %865 = vadd.xlane.f32.xlu0 %v864
    %v866 = vpop.xlane.xlu0 %865
    %v867 = vrcp.pop %v863
    %v868 = vrcp.pop %v866
    %v869 = vmul.f32 %v858, %v867
    %v870 = vmul.f32 %v860, %v868
    %v871 = vpack.c.bf16 %v869, %v869
    %v872 = vpack.c.bf16 %v870, %v870
    %873 = vrot.lane.b32.xlu0 %v213, 112
    %v874 = vpop.permute.xlu0 %873
    %v876 = vsel %vm215, %v871, 0
    %v879 = vsel %vm335, %v874, 0
    %881 = vmatprep.subr.bf16.mxu0 0
    %882 = vmatpush1.bf16.msra.mxu0 %v879
    %883 = vmatprep.subr.bf16.mxu0 0
    %884 = vmatpush1.bf16.msra.mxu0 0
    %885 = vmatprep.subr.bf16.mxu0 0
    %886 = vmatpush1.bf16.msra.mxu0 0
    %887 = vmatprep.subr.bf16.mxu0 0
    %888 = vmatpush1.bf16.msra.mxu0 0
    %889 = vmatprep.subr.bf16.mxu0 0
    %890 = vmatpush1.bf16.msra.mxu0 0
    %891 = vmatprep.subr.bf16.mxu0 0
    %892 = vmatpush1.bf16.msra.mxu0 0
    %893 = vmatprep.subr.bf16.mxu0 0
    %894 = vmatpush1.bf16.msra.mxu0 0
    %895 = vmatprep.subr.bf16.mxu0 0
    %896 = vmatpush1.bf16.msra.mxu0 0
    %897 = vmatprep.subr.bf16.mxu0 0
    %898 = vmatpush1.bf16.msra.mxu0 0
    %899 = vmatprep.subr.bf16.mxu0 0
    %900 = vmatpush1.bf16.msra.mxu0 0
    %901 = vmatprep.subr.bf16.mxu0 0
    %902 = vmatpush1.bf16.msra.mxu0 0
    %903 = vmatprep.subr.bf16.mxu0 0
    %904 = vmatpush1.bf16.msra.mxu0 0
    %905 = vmatprep.subr.bf16.mxu0 0
    %906 = vmatpush1.bf16.msra.mxu0 0
    %907 = vmatprep.subr.bf16.mxu0 0
    %908 = vmatpush1.bf16.msra.mxu0 0
    %909 = vmatprep.subr.bf16.mxu0 0
    %910 = vmatpush1.bf16.msra.mxu0 0
    %911 = vmatprep.subr.bf16.mxu0 0
    %912 = vmatpush1.bf16.msra.mxu0 0
    %913 = vmatprep.mubr.bf16.mxu0 0
    %914 = vmatmul.mubr.bf16.gmra.mrb[0].mxu0 %v876
    %v915 = vpop.f32.mrb[0].mxu0
    %v916 = vadd.f32 0.0, %v915
    %v917 = vpop.f32.mrb[0].mxu0
    %v918 = vpop.f32.mrb[0].mxu0
    %v919 = vpop.f32.mrb[0].mxu0
    %920 = vdwg.mxu0
    %921 = vrot.lane.b32.xlu0 %v214, 112
    %v922 = vpop.permute.xlu0 %921
    %v924 = vsel %vm215, %v872, 0
    %v927 = vsel %vm335, %v922, 0
    %929 = vmatprep.subr.bf16.mxu0 0
    %930 = vmatpush1.bf16.msra.mxu0 %v927
    %931 = vmatprep.subr.bf16.mxu0 0
    %932 = vmatpush1.bf16.msra.mxu0 0
    %933 = vmatprep.subr.bf16.mxu0 0
    %934 = vmatpush1.bf16.msra.mxu0 0
    %935 = vmatprep.subr.bf16.mxu0 0
    %936 = vmatpush1.bf16.msra.mxu0 0
    %937 = vmatprep.subr.bf16.mxu0 0
    %938 = vmatpush1.bf16.msra.mxu0 0
    %939 = vmatprep.subr.bf16.mxu0 0
    %940 = vmatpush1.bf16.msra.mxu0 0
    %941 = vmatprep.subr.bf16.mxu0 0
    %942 = vmatpush1.bf16.msra.mxu0 0
    %943 = vmatprep.subr.bf16.mxu0 0
    %944 = vmatpush1.bf16.msra.mxu0 0
    %945 = vmatprep.subr.bf16.mxu0 0
    %946 = vmatpush1.bf16.msra.mxu0 0
    %947 = vmatprep.subr.bf16.mxu0 0
    %948 = vmatpush1.bf16.msra.mxu0 0
    %949 = vmatprep.subr.bf16.mxu0 0
    %950 = vmatpush1.bf16.msra.mxu0 0
    %951 = vmatprep.subr.bf16.mxu0 0
    %952 = vmatpush1.bf16.msra.mxu0 0
    %953 = vmatprep.subr.bf16.mxu0 0
    %954 = vmatpush1.bf16.msra.mxu0 0
    %955 = vmatprep.subr.bf16.mxu0 0
    %956 = vmatpush1.bf16.msra.mxu0 0
    %957 = vmatprep.subr.bf16.mxu0 0
    %958 = vmatpush1.bf16.msra.mxu0 0
    %959 = vmatprep.subr.bf16.mxu0 0
    %960 = vmatpush1.bf16.msra.mxu0 0
    %961 = vmatprep.mubr.bf16.mxu0 0
    %962 = vmatmul.mubr.bf16.gmra.mrb[0].mxu0 %v924
    %v963 = vpop.f32.mrb[0].mxu0
    %v964 = vadd.f32 0.0, %v963
    %v965 = vpop.f32.mrb[0].mxu0
    %v966 = vpop.f32.mrb[0].mxu0
    %v967 = vpop.f32.mrb[0].mxu0
    %968 = vdwg.mxu0
    %v971 = vcombine.low %v916, %v964
    %v973 = vpack.c.bf16 %v971, %v971
    %v975 = vsel %vm215, %v973, 0
    %v978 = vsel %vm335, %v76, 0
    %980 = vmatprep.subr.bf16.mxu0 0
    %981 = vmatpush1.bf16.msra.mxu0 %v978
    %982 = vmatprep.subr.bf16.mxu0 0
    %983 = vmatpush1.bf16.msra.mxu0 0
    %984 = vmatprep.subr.bf16.mxu0 0
    %985 = vmatpush1.bf16.msra.mxu0 0
    %986 = vmatprep.subr.bf16.mxu0 0
    %987 = vmatpush1.bf16.msra.mxu0 0
    %988 = vmatprep.subr.bf16.mxu0 0
    %989 = vmatpush1.bf16.msra.mxu0 0
    %990 = vmatprep.subr.bf16.mxu0 0
    %991 = vmatpush1.bf16.msra.mxu0 0
    %992 = vmatprep.subr.bf16.mxu0 0
    %993 = vmatpush1.bf16.msra.mxu0 0
    %994 = vmatprep.subr.bf16.mxu0 0
    %995 = vmatpush1.bf16.msra.mxu0 0
    %996 = vmatprep.subr.bf16.mxu0 0
    %997 = vmatpush1.bf16.msra.mxu0 0
    %998 = vmatprep.subr.bf16.mxu0 0
    %999 = vmatpush1.bf16.msra.mxu0 0
    %1000 = vmatprep.subr.bf16.mxu0 0
    %1001 = vmatpush1.bf16.msra.mxu0 0
    %1002 = vmatprep.subr.bf16.mxu0 0
    %1003 = vmatpush1.bf16.msra.mxu0 0
    %1004 = vmatprep.subr.bf16.mxu0 0
    %1005 = vmatpush1.bf16.msra.mxu0 0
    %1006 = vmatprep.subr.bf16.mxu0 0
    %1007 = vmatpush1.bf16.msra.mxu0 0
    %1008 = vmatprep.subr.bf16.mxu0 0
    %1009 = vmatpush1.bf16.msra.mxu0 0
    %1010 = vmatprep.subr.bf16.mxu0 0
    %1011 = vmatpush1.bf16.msra.mxu0 0
    %1012 = vmatprep.mubr.bf16.mxu0 0
    %1013 = vmatmul.mubr.bf16.gmra.mrb[0].mxu0 %v975
    %v1014 = vpop.f32.mrb[0].mxu0
    %v1015 = vadd.f32 0.0, %v1014
    %v1016 = vpop.f32.mrb[0].mxu0
    %v1017 = vpop.f32.mrb[0].mxu0
    %v1018 = vpop.f32.mrb[0].mxu0
    %1019 = vdwg.mxu0
    %v1020 = vadd.f32 %v747, %v1015
    %1021 = vrot.lane.b32.xlu0 %v437, 104
    %v1022 = vpop.permute.xlu0 %1021
    %1023 = vrot.lane.b32.xlu0 %v208, 104
    %v1024 = vpop.permute.xlu0 %1023
    %v1026 = vsel %vm215, %v1022, 0
    %v1029 = vsel %vm215, %v1024, 0
    %1031 = vmatprep.subr.bf16.mxu0 0
    %1032 = vmatpush1.bf16.xpose.msra.mxu0 %v1029
    %1033 = vmatprep.subr.bf16.mxu0 0
    %1034 = vmatpush1.bf16.xpose.msra.mxu0 0
    %1035 = vmatprep.subr.bf16.mxu0 0
    %1036 = vmatpush1.bf16.xpose.msra.mxu0 0
    %1037 = vmatprep.subr.bf16.mxu0 0
    %1038 = vmatpush1.bf16.xpose.msra.mxu0 0
    %1039 = vmatprep.subr.bf16.mxu0 0
    %1040 = vmatpush1.bf16.xpose.msra.mxu0 0
    %1041 = vmatprep.subr.bf16.mxu0 0
    %1042 = vmatpush1.bf16.xpose.msra.mxu0 0
    %1043 = vmatprep.subr.bf16.mxu0 0
    %1044 = vmatpush1.bf16.xpose.msra.mxu0 0
    %1045 = vmatprep.subr.bf16.mxu0 0
    %1046 = vmatpush1.bf16.xpose.msra.mxu0 0
    %1047 = vmatprep.subr.bf16.mxu0 0
    %1048 = vmatpush1.bf16.xpose.msra.mxu0 0
    %1049 = vmatprep.subr.bf16.mxu0 0
    %1050 = vmatpush1.bf16.xpose.msra.mxu0 0
    %1051 = vmatprep.subr.bf16.mxu0 0
    %1052 = vmatpush1.bf16.xpose.msra.mxu0 0
    %1053 = vmatprep.subr.bf16.mxu0 0
    %1054 = vmatpush1.bf16.xpose.msra.mxu0 0
    %1055 = vmatprep.subr.bf16.mxu0 0
    %1056 = vmatpush1.bf16.xpose.msra.mxu0 0
    %1057 = vmatprep.subr.bf16.mxu0 0
    %1058 = vmatpush1.bf16.xpose.msra.mxu0 0
    %1059 = vmatprep.subr.bf16.mxu0 0
    %1060 = vmatpush1.bf16.xpose.msra.mxu0 0
    %1061 = vmatprep.subr.bf16.mxu0 0
    %1062 = vmatpush1.bf16.xpose.msra.mxu0 0
    %1063 = vmatprep.mubr.bf16.mxu0 0
    %1064 = vmatmul.mubr.bf16.gmra.mrb[0].mxu0 %v1026
    %v1065 = vpop.f32.mrb[0].mxu0
    %v1066 = vadd.f32 0.0, %v1065
    %v1067 = vpop.f32.mrb[0].mxu0
    %v1068 = vpop.f32.mrb[0].mxu0
    %v1069 = vpop.f32.mrb[0].mxu0
    %1070 = vdwg.mxu0
    %1071 = vrot.lane.b32.xlu0 %v209, 104
    %v1072 = vpop.permute.xlu0 %1071
    %v1074 = vsel %vm215, %v1072, 0
    %1076 = vmatprep.subr.bf16.mxu0 0
    %1077 = vmatpush1.bf16.xpose.msra.mxu0 %v1074
    %1078 = vmatprep.subr.bf16.mxu0 0
    %1079 = vmatpush1.bf16.xpose.msra.mxu0 0
    %1080 = vmatprep.subr.bf16.mxu0 0
    %1081 = vmatpush1.bf16.xpose.msra.mxu0 0
    %1082 = vmatprep.subr.bf16.mxu0 0
    %1083 = vmatpush1.bf16.xpose.msra.mxu0 0
    %1084 = vmatprep.subr.bf16.mxu0 0
    %1085 = vmatpush1.bf16.xpose.msra.mxu0 0
    %1086 = vmatprep.subr.bf16.mxu0 0
    %1087 = vmatpush1.bf16.xpose.msra.mxu0 0
    %1088 = vmatprep.subr.bf16.mxu0 0
    %1089 = vmatpush1.bf16.xpose.msra.mxu0 0
    %1090 = vmatprep.subr.bf16.mxu0 0
    %1091 = vmatpush1.bf16.xpose.msra.mxu0 0
    %1092 = vmatprep.subr.bf16.mxu0 0
    %1093 = vmatpush1.bf16.xpose.msra.mxu0 0
    %1094 = vmatprep.subr.bf16.mxu0 0
    %1095 = vmatpush1.bf16.xpose.msra.mxu0 0
    %1096 = vmatprep.subr.bf16.mxu0 0
    %1097 = vmatpush1.bf16.xpose.msra.mxu0 0
    %1098 = vmatprep.subr.bf16.mxu0 0
    %1099 = vmatpush1.bf16.xpose.msra.mxu0 0
    %1100 = vmatprep.subr.bf16.mxu0 0
    %1101 = vmatpush1.bf16.xpose.msra.mxu0 0
    %1102 = vmatprep.subr.bf16.mxu0 0
    %1103 = vmatpush1.bf16.xpose.msra.mxu0 0
    %1104 = vmatprep.subr.bf16.mxu0 0
    %1105 = vmatpush1.bf16.xpose.msra.mxu0 0
    %1106 = vmatprep.subr.bf16.mxu0 0
    %1107 = vmatpush1.bf16.xpose.msra.mxu0 0
    %1108 = vmatprep.mubr.bf16.mxu0 0
    %1109 = vmatmul.mubr.bf16.gmra.mrb[0].mxu0 %v1026
    %v1110 = vpop.f32.mrb[0].mxu0
    %v1111 = vadd.f32 0.0, %v1110
    %v1112 = vpop.f32.mrb[0].mxu0
    %v1113 = vpop.f32.mrb[0].mxu0
    %v1114 = vpop.f32.mrb[0].mxu0
    %1115 = vdwg.mxu0
    %v1116 = vmul.f32 %v1066, 0.17677669
    %v1117 = vmul.f32 %v1111, 0.17677669
    %v1118 = vsel %vm307, %v1116, -inf
    %1119 = vmax.xlane.f32.xlu0 %v1118
    %v1120 = vpop.xlane.xlu0 %1119
    %v1121 = vsel %vm307, %v1117, -inf
    %1122 = vmax.xlane.f32.xlu0 %v1121
    %v1123 = vpop.xlane.xlu0 %1122
    %v1124 = vsub.f32 %v1116, %v1120
    %v1125 = vsub.f32 %v1117, %v1123
    %v1126 = vmul.f32 %v1124, 1.442695
    %v1127 = vpow.pop %v1126
    %v1128 = vmul.f32 %v1125, 1.442695
    %v1129 = vpow.pop %v1128
    %v1130 = vsel %vm307, %v1127, 0.0
    %1131 = vadd.xlane.f32.xlu0 %v1130
    %v1132 = vpop.xlane.xlu0 %1131
    %v1133 = vsel %vm307, %v1129, 0.0
    %1134 = vadd.xlane.f32.xlu0 %v1133
    %v1135 = vpop.xlane.xlu0 %1134
    %v1136 = vrcp.pop %v1132
    %v1137 = vrcp.pop %v1135
    %v1138 = vmul.f32 %v1127, %v1136
    %v1139 = vmul.f32 %v1129, %v1137
    %v1140 = vpack.c.bf16 %v1138, %v1138
    %v1141 = vpack.c.bf16 %v1139, %v1139
    %1142 = vrot.lane.b32.xlu0 %v213, 104
    %v1143 = vpop.permute.xlu0 %1142
    %v1145 = vsel %vm215, %v1140, 0
    %v1148 = vsel %vm335, %v1143, 0
    %1150 = vmatprep.subr.bf16.mxu0 0
    %1151 = vmatpush1.bf16.msra.mxu0 %v1148
    %1152 = vmatprep.subr.bf16.mxu0 0
    %1153 = vmatpush1.bf16.msra.mxu0 0
    %1154 = vmatprep.subr.bf16.mxu0 0
    %1155 = vmatpush1.bf16.msra.mxu0 0
    %1156 = vmatprep.subr.bf16.mxu0 0
    %1157 = vmatpush1.bf16.msra.mxu0 0
    %1158 = vmatprep.subr.bf16.mxu0 0
    %1159 = vmatpush1.bf16.msra.mxu0 0
    %1160 = vmatprep.subr.bf16.mxu0 0
    %1161 = vmatpush1.bf16.msra.mxu0 0
    %1162 = vmatprep.subr.bf16.mxu0 0
    %1163 = vmatpush1.bf16.msra.mxu0 0
    %1164 = vmatprep.subr.bf16.mxu0 0
    %1165 = vmatpush1.bf16.msra.mxu0 0
    %1166 = vmatprep.subr.bf16.mxu0 0
    %1167 = vmatpush1.bf16.msra.mxu0 0
    %1168 = vmatprep.subr.bf16.mxu0 0
    %1169 = vmatpush1.bf16.msra.mxu0 0
    %1170 = vmatprep.subr.bf16.mxu0 0
    %1171 = vmatpush1.bf16.msra.mxu0 0
    %1172 = vmatprep.subr.bf16.mxu0 0
    %1173 = vmatpush1.bf16.msra.mxu0 0
    %1174 = vmatprep.subr.bf16.mxu0 0
    %1175 = vmatpush1.bf16.msra.mxu0 0
    %1176 = vmatprep.subr.bf16.mxu0 0
    %1177 = vmatpush1.bf16.msra.mxu0 0
    %1178 = vmatprep.subr.bf16.mxu0 0
    %1179 = vmatpush1.bf16.msra.mxu0 0
    %1180 = vmatprep.subr.bf16.mxu0 0
    %1181 = vmatpush1.bf16.msra.mxu0 0
    %1182 = vmatprep.mubr.bf16.mxu0 0
    %1183 = vmatmul.mubr.bf16.gmra.mrb[0].mxu0 %v1145
    %v1184 = vpop.f32.mrb[0].mxu0
    %v1185 = vadd.f32 0.0, %v1184
    %v1186 = vpop.f32.mrb[0].mxu0
    %v1187 = vpop.f32.mrb[0].mxu0
    %v1188 = vpop.f32.mrb[0].mxu0
    %1189 = vdwg.mxu0
    %1190 = vrot.lane.b32.xlu0 %v214, 104
    %v1191 = vpop.permute.xlu0 %1190
    %v1193 = vsel %vm215, %v1141, 0
    %v1196 = vsel %vm335, %v1191, 0
    %1198 = vmatprep.subr.bf16.mxu0 0
    %1199 = vmatpush1.bf16.msra.mxu0 %v1196
    %1200 = vmatprep.subr.bf16.mxu0 0
    %1201 = vmatpush1.bf16.msra.mxu0 0
    %1202 = vmatprep.subr.bf16.mxu0 0
    %1203 = vmatpush1.bf16.msra.mxu0 0
    %1204 = vmatprep.subr.bf16.mxu0 0
    %1205 = vmatpush1.bf16.msra.mxu0 0
    %1206 = vmatprep.subr.bf16.mxu0 0
    %1207 = vmatpush1.bf16.msra.mxu0 0
    %1208 = vmatprep.subr.bf16.mxu0 0
    %1209 = vmatpush1.bf16.msra.mxu0 0
    %1210 = vmatprep.subr.bf16.mxu0 0
    %1211 = vmatpush1.bf16.msra.mxu0 0
    %1212 = vmatprep.subr.bf16.mxu0 0
    %1213 = vmatpush1.bf16.msra.mxu0 0
    %1214 = vmatprep.subr.bf16.mxu0 0
    %1215 = vmatpush1.bf16.msra.mxu0 0
    %1216 = vmatprep.subr.bf16.mxu0 0
    %1217 = vmatpush1.bf16.msra.mxu0 0
    %1218 = vmatprep.subr.bf16.mxu0 0
    %1219 = vmatpush1.bf16.msra.mxu0 0
    %1220 = vmatprep.subr.bf16.mxu0 0
    %1221 = vmatpush1.bf16.msra.mxu0 0
    %1222 = vmatprep.subr.bf16.mxu0 0
    %1223 = vmatpush1.bf16.msra.mxu0 0
    %1224 = vmatprep.subr.bf16.mxu0 0
    %1225 = vmatpush1.bf16.msra.mxu0 0
    %1226 = vmatprep.subr.bf16.mxu0 0
    %1227 = vmatpush1.bf16.msra.mxu0 0
    %1228 = vmatprep.subr.bf16.mxu0 0
    %1229 = vmatpush1.bf16.msra.mxu0 0
    %1230 = vmatprep.mubr.bf16.mxu0 0
    %1231 = vmatmul.mubr.bf16.gmra.mrb[0].mxu0 %v1193
    %v1232 = vpop.f32.mrb[0].mxu0
    %v1233 = vadd.f32 0.0, %v1232
    %v1234 = vpop.f32.mrb[0].mxu0
    %v1235 = vpop.f32.mrb[0].mxu0
    %v1236 = vpop.f32.mrb[0].mxu0
    %1237 = vdwg.mxu0
    %v1240 = vcombine.low %v1185, %v1233
    %v1242 = vpack.c.bf16 %v1240, %v1240
    %v1244 = vsel %vm215, %v1242, 0
    %v1247 = vsel %vm335, %v77, 0
    %1249 = vmatprep.subr.bf16.mxu0 0
    %1250 = vmatpush1.bf16.msra.mxu0 %v1247
    %1251 = vmatprep.subr.bf16.mxu0 0
    %1252 = vmatpush1.bf16.msra.mxu0 0
    %1253 = vmatprep.subr.bf16.mxu0 0
    %1254 = vmatpush1.bf16.msra.mxu0 0
    %1255 = vmatprep.subr.bf16.mxu0 0
    %1256 = vmatpush1.bf16.msra.mxu0 0
    %1257 = vmatprep.subr.bf16.mxu0 0
    %1258 = vmatpush1.bf16.msra.mxu0 0
    %1259 = vmatprep.subr.bf16.mxu0 0
    %1260 = vmatpush1.bf16.msra.mxu0 0
    %1261 = vmatprep.subr.bf16.mxu0 0
    %1262 = vmatpush1.bf16.msra.mxu0 0
    %1263 = vmatprep.subr.bf16.mxu0 0
    %1264 = vmatpush1.bf16.msra.mxu0 0
    %1265 = vmatprep.subr.bf16.mxu0 0
    %1266 = vmatpush1.bf16.msra.mxu0 0
    %1267 = vmatprep.subr.bf16.mxu0 0
    %1268 = vmatpush1.bf16.msra.mxu0 0
    %1269 = vmatprep.subr.bf16.mxu0 0
    %1270 = vmatpush1.bf16.msra.mxu0 0
    %1271 = vmatprep.subr.bf16.mxu0 0
    %1272 = vmatpush1.bf16.msra.mxu0 0
    %1273 = vmatprep.subr.bf16.mxu0 0
    %1274 = vmatpush1.bf16.msra.mxu0 0
    %1275 = vmatprep.subr.bf16.mxu0 0
    %1276 = vmatpush1.bf16.msra.mxu0 0
    %1277 = vmatprep.subr.bf16.mxu0 0
    %1278 = vmatpush1.bf16.msra.mxu0 0
    %1279 = vmatprep.subr.bf16.mxu0 0
    %1280 = vmatpush1.bf16.msra.mxu0 0
    %1281 = vmatprep.mubr.bf16.mxu0 0
    %1282 = vmatmul.mubr.bf16.gmra.mrb[0].mxu0 %v1244
    %v1283 = vpop.f32.mrb[0].mxu0
    %v1284 = vadd.f32 0.0, %v1283
    %v1285 = vpop.f32.mrb[0].mxu0
    %v1286 = vpop.f32.mrb[0].mxu0
    %v1287 = vpop.f32.mrb[0].mxu0
    %1288 = vdwg.mxu0
    %v1289 = vadd.f32 %v1020, %v1284
    %v1290 = vlaneseq
    %v1291 = vshrl.u32 %v1290, 7
    %v1292 = vsub.s32 2, %v1291
    %v1293 = vrot.slane %v63, %v1292
    %v1294 = vadd.f32 %v1289, %v1293
    %v1296 = vrot.slane %v61, 4
    %v1298 = vsel %vm335, %v61, %v1296
    %v1299 = vadd.f32 %v1298, %v1294
    %v1300 = vsel %vm101, %v1299, 0.0
    %1301 = vadd.xlane.f32.xlu0 %v1300
    %v1302 = vpop.xlane.xlu0 %1301
    %v1303 = vrcp.pop 32.0
    %v1304 = vmul.f32 %v1302, %v1303
    %v1305 = vsub.f32 %v1299, %v1304
    %v1306 = vmul.f32 %v1305, %v1305
    %v1307 = vsel %vm101, %v1306, 0.0
    %1308 = vadd.xlane.f32.xlu0 %v1307
    %v1309 = vpop.xlane.xlu0 %1308
    %v1310 = vmul.f32 %v1309, %v1303
    %v1311 = vadd.f32 %v1310, 1e-05
    %v1312 = vrsqrt.pop %v1311
    %v1313 = vmul.f32 %v1305, %v1312
    %v1314 = vlaneseq
    %v1315 = vshrl.u32 %v1314, 7
    %v1316 = vsub.s32 3, %v1315
    %v1317 = vrot.slane %v63, %v1316
    %v1318 = vmul.f32 %v1313, %v1317
    %v1319 = vlaneseq
    %v1320 = vshrl.u32 %v1319, 7
    %v1321 = vsub.s32 4, %v1320
    %v1322 = vrot.slane %v63, %v1321
    %v1323 = vadd.f32 %v1318, %v1322
    %v1324 = vmax.f32 %v1323, 0.0
    %v1325 = vadd.f32 %v1323, %v1324
    %v1326 = vsel %vm101, %v1325, 0.0
    %1327 = vadd.xlane.f32.xlu0 %v1326
    %v1328 = vpop.xlane.xlu0 %1327
    %v1329 = vmul.f32 %v1328, %v1303
    %v1330 = vsub.f32 %v1325, %v1329
    %v1331 = vmul.f32 %v1330, %v1330
    %v1332 = vsel %vm101, %v1331, 0.0
    %1333 = vadd.xlane.f32.xlu0 %v1332
    %v1334 = vpop.xlane.xlu0 %1333
    %v1335 = vmul.f32 %v1334, %v1303
    %v1336 = vadd.f32 %v1335, 1e-05
    %v1337 = vrsqrt.pop %v1336
    %v1338 = vmul.f32 %v1330, %v1337
    %v1339 = vlaneseq
    %v1340 = vshrl.u32 %v1339, 7
    %v1341 = vsub.s32 5, %v1340
    %v1342 = vrot.slane %v63, %v1341
    %v1343 = vmul.f32 %v1338, %v1342
    %v1344 = vlaneseq
    %v1345 = vshrl.u32 %v1344, 7
    %v1346 = vsub.s32 6, %v1345
    %v1347 = vrot.slane %v63, %v1346
    %v1348 = vadd.f32 %v1343, %v1347
    %1349 = vst.msk [vmem:[#allocation8] sm:$0xff] %vm101, %v1348
    // Predicated region
    $region34: #{tpu_custom_call.1} parent=1 // pred_check
      _
    $region35: #{tpu_custom_call.1} parent=1 // pred_check_branch
      %1351 = sbr.rel (0) target = $region37
    $region36: #{tpu_custom_call.1} parent=1 // pred_region
      %s1353 = ssub.s32 128, 128
      %1354 = vsyncadd [#allocation4], %s1353
      %s1356 = sshll.u32 [#allocation8], 4
      %s1357 = int_to_ptr.vmem [resolvable:$true] %s1356
      %1359 = dma.vmem_to_hbm [thread:$0]  %s1357, 128, %s5, [#allocation4]
    $region37: #{tpu_custom_call.1} parent=1 // pred_fallthru
      _
    // Predicated region
    $region38: #{tpu_custom_call.1} parent=1 // pred_check
      _
    $region39: #{tpu_custom_call.1} parent=1 // pred_check_branch
      %1361 = sbr.rel (0) target = $region41
    $region40: #{tpu_custom_call.1} parent=1 // pred_region
      %1362 = dma.done [#allocation4], 128
    $region41: #{tpu_custom_call.1} parent=1 // pred_fallthru
      _
    %1363 = vsyncpa [#allocation3], 1
    %1364 = vsyncpa [#allocation6], 1
    %1365 = vsyncpa [#allocation4], 1

</llo_original>
